<compile_context>
chip_gen: v7x
topology: tpu7x:2x2x1
jax: 0.10.0
libtpu: 0.0.40
codegen_flags: <defaults>
</compile_context>

<pallas_src>
import functools

import numpy as np
import jax
import jax.numpy as jnp
from jax import lax
from jax.experimental import pallas as pl
from jax.experimental.pallas import tpu as pltpu

NEG_SLOPE = 0.2
_SUBLANE = 8
# Lane budget per grid block (batch images folded onto lanes).  At f32 I/O +
# bf16 operands the per-lane VMEM footprint is well under 1 KB, so 4K lanes is
# a comfortable fit even under v7x's 32 MiB scoped / 64 MiB physical VMEM.
MAX_LANES_PER_BLOCK = 4096


def _leaky(v):
    # LeakyReLU(0.2) == max(v, 0.2*v) for slope < 1.
    return jnp.maximum(v, NEG_SLOPE * v)


def _round_up(v, m):
    return (v + m - 1) // m * m


# ----------------------------------------------------------------------------
# Fused Pallas kernel (one lane-block of batch images per grid step)
# ----------------------------------------------------------------------------
def _fused_forward_kernel(x_ref, mask_ref, wstk_ref, w2_ref, o_ref, *, W):
    """Whole forward pass, channels on sublanes, batch*H*W on lanes.

    x_ref:    (1, cin_p, L)        input; channel `cin` is a constant-ones
                                   channel carrying the biases, rest zero-pad
    mask_ref: (9, L)               per-tap border-validity mask (the pad=1 halo;
                                   also zeroes cross-image wraps on the lane axis)
    wstk_ref: (3*cout, 9*cin_p)    [twocon1 ; resnet conv1 ; resnet 1x1 skip]
                                   as one im2col weight matrix, biases folded in
    w2_ref:   (9, cout, cout)      resnet conv2, one (cout, cout) slab per tap
    o_ref:    (1, cout, L)         output
    """
    f32 = jnp.float32
    cin_p = x_ref.shape[1]
    L = x_ref.shape[2]
    cout = w2_ref.shape[1]
    cdt = wstk_ref.dtype                      # MXU operand dtype (bf16 or f32)

    def taps(img):
        """Yield the 9 lane-rolled, border-masked taps of `img` (f32)."""
        for dy in range(3):
            for dx in range(3):
                t = dy * 3 + dx
                off = (dy - 1) * W + (dx - 1)
                s = img if off == 0 else pltpu.roll(img, shift=(-off) % L, axis=1)
                if t != 4:                    # centre tap needs no mask
                    s = s * mask_ref[t:t + 1, :]
                yield t, s

    x = x_ref[0].astype(f32)                                      # (cin_p, L)

    # --- layer 1: ONE stacked MXU pass  [wt; w1; ws] @ im2col(x) -----------
    # im2col lives in registers (each tap is a sublane-aligned 8-row slab);
    # all biases ride in the constant-ones channel's centre-tap column.
    px = jnp.concatenate([s for _, s in taps(x)], axis=0).astype(cdt)
    stk = jnp.dot(wstk_ref[...], px, preferred_element_type=f32)  # (3*cout, L)
    main = _leaky(stk[:cout])                  # act(twocon1(x))
    h1 = _leaky(stk[cout:2 * cout])            # act(resnet conv1(x))
    acc = stk[2 * cout:]                       # skip(x) + bs + b2 (folded)

    # --- layer 2: resnet conv2 via per-tap accumulation (no im2col scratch) -
    for t, s in taps(h1):
        acc = acc + jnp.dot(w2_ref[t], s.astype(cdt), preferred_element_type=f32)

    # --- res = act(conv2 + skip);  out = res + main -------------------------
    o_ref[0] = (_leaky(acc) + main).astype(o_ref.dtype)


# ----------------------------------------------------------------------------
# Host-side helpers
# ----------------------------------------------------------------------------
def _tap_mask(H, W):
    """(9, H*W) f32: 1.0 where the 3x3 tap hits a real pixel, 0.0 on the halo."""
    m = np.zeros((9, H * W), np.float32)
    h = np.arange(H * W) // W
    w = np.arange(H * W) % W
    for dy in range(3):
        for dx in range(3):
            valid = ((h + dy - 1 >= 0) & (h + dy - 1 < H) &
                     (w + dx - 1 >= 0) & (w + dx - 1 < W))
            m[dy * 3 + dx] = valid.astype(np.float32)
    return m


def pack_params(p, matmul_dtype=jnp.bfloat16):
    """Pack HWIO conv params into the kernel's two matmul operands (done once).

    matmul_dtype: bf16 (default, fast MXU path) or f32 (reference precision).
    """
    cin, cout = p["tc1_w"].shape[2], p["tc1_w"].shape[3]
    assert cout % _SUBLANE == 0, "chan_embed must be a multiple of 8"
    # channel padding includes one constant-ones channel that carries biases
    cin_p = _round_up(cin + 1, _SUBLANE)
    ones_ch = cin
    center_col = 4 * cin_p  # columns of the centre tap start here

    def conv3x3_cols(w_hwio):
        # (3,3,cin,cout) -> (cout, 9*cin_p), column order (tap, channel)
        w = jnp.pad(w_hwio, ((0, 0), (0, 0), (0, cin_p - cin), (0, 0)))
        return w.reshape(9 * cin_p, cout).T

    wt = conv3x3_cols(p["tc1_w"])
    w1 = conv3x3_cols(p["rb1_w1"])
    # 1x1 skip: only the centre-tap columns of its row block are nonzero.
    ws = jnp.zeros((cout, 9 * cin_p), jnp.float32)
    ws = ws.at[:, center_col:center_col + cin].set(p["rb1_ws"][0, 0].T)
    # Fold biases into the ones-channel centre-tap column.  conv2's bias is
    # folded into the skip row (res = act(conv2(h1) + b2 + skip(x) + bs)).
    wt = wt.at[:, center_col + ones_ch].set(p["tc1_b"])
    w1 = w1.at[:, center_col + ones_ch].set(p["rb1_b1"])
    ws = ws.at[:, center_col + ones_ch].set(p["rb1_bs"] + p["rb1_b2"])
    wstk = jnp.concatenate([wt, w1, ws], axis=0).astype(matmul_dtype)

    # resnet conv2: (3,3,cout,cout) HWIO -> (9, cout_out, cout_in)
    w2 = jnp.transpose(p["rb1_w2"].reshape(9, cout, cout), (0, 2, 1))
    return {"wstk": wstk, "w2": w2.astype(matmul_dtype)}


# ----------------------------------------------------------------------------
# Forward pass (single pallas_call)
# ----------------------------------------------------------------------------
@jax.jit
def network_forward(x_nchw, kp):
    """x_nchw: (N, Cin, H, W) -> (N, Cout, H, W)."""
    N, cin, H, W = x_nchw.shape
    HW = H * W
    wstk, w2 = kp["wstk"], kp["w2"]
    cout = w2.shape[1]
    cin_p = wstk.shape[1] // 9

    # ---- block policy: fat lane runs per step, but keep >=2 "parallel" grid
    # blocks when the batch allows so both v7x TensorCores get work. ---------
    B_blk = max(1, min(N, MAX_LANES_PER_BLOCK // HW))
    n_blocks = -(-N // B_blk)
    if n_blocks == 1 and N > 1:
        n_blocks, B_blk = 2, -(-N // 2)
    Np = n_blocks * B_blk
    L = B_blk * HW

    # ---- one-time input plumbing: channel pad (ones channel carries biases),
    # fold batch onto lanes. --------------------------------------------------
    x = jnp.pad(x_nchw, ((0, Np - N), (0, 0), (0, 0), (0, 0)))
    ones = jnp.ones((Np, 1, H, W), x.dtype)
    zeros = jnp.zeros((Np, cin_p - cin - 1, H, W), x.dtype)
    x = jnp.concatenate([x, ones, zeros], axis=1)               # (Np, cin_p, H, W)
    x = (x.reshape(n_blocks, B_blk, cin_p, HW)
          .transpose(0, 2, 1, 3)
          .reshape(n_blocks, cin_p, L))                          # lanes = b*HW + p

    # tap mask, tiled per image along the lane axis (also kills cross-image wraps)
    mask = jnp.asarray(np.tile(_tap_mask(H, W), (1, B_blk)))     # (9, L)

    kernel = functools.partial(_fused_forward_kernel, W=W)

    out = pl.pallas_call(
        kernel,
        out_shape=jax.ShapeDtypeStruct((n_blocks, cout, L), x_nchw.dtype),
        grid=(n_blocks,),
        in_specs=[
            pl.BlockSpec((1, cin_p, L), lambda n: (n, 0, 0)),    # x block
            pl.BlockSpec((9, L), lambda n: (0, 0)),              # tap mask
            pl.BlockSpec(wstk.shape, lambda n: (0, 0)),          # stacked weights
            pl.BlockSpec(w2.shape, lambda n: (0, 0, 0)),         # conv2 weights
        ],
        out_specs=pl.BlockSpec((1, cout, L), lambda n: (n, 0, 0)),
        compiler_params=pltpu.CompilerParams(
            dimension_semantics=("parallel",)),
    )(x, mask, wstk, w2)

    out = (out.reshape(n_blocks, cout, B_blk, HW)
              .transpose(0, 2, 1, 3)
              .reshape(Np, cout, HW))[:N]
    return out.reshape(N, cout, H, W)


# ----------------------------------------------------------------------------
# Parameter init (deterministic, PyTorch-Conv2d-like uniform bounds), HWIO
# ----------------------------------------------------------------------------
def _conv_params(key, kh, kw, cin, cout):
    wk, bk = jax.random.split(key)
    fan_in = cin * kh * kw
    bound = 1.0 / (fan_in ** 0.5)
    w = jax.random.uniform(wk, (kh, kw, cin, cout), jnp.float32, -bound, bound)
    b = jax.random.uniform(bk, (cout,), jnp.float32, -bound, bound)
    return w, b


def init_params(key, n_chan, chan_embed):
    keys = jax.random.split(key, 4)
    p = {}
    # twocon1: Conv2d(n_chan, chan_embed, 3, padding=1)
    p["tc1_w"], p["tc1_b"] = _conv_params(keys[0], 3, 3, n_chan, chan_embed)
    # resnet_block1(n_chan, chan_embed): conv1 3x3, conv2 3x3, skip 1x1
    p["rb1_w1"], p["rb1_b1"] = _conv_params(keys[1], 3, 3, n_chan, chan_embed)
    p["rb1_w2"], p["rb1_b2"] = _conv_params(keys[2], 3, 3, chan_embed, chan_embed)
    p["rb1_ws"], p["rb1_bs"] = _conv_params(keys[3], 1, 1, n_chan, chan_embed)
    # twocon2 / twocon3 / resnet_block2 / resnet_block3 exist in __init__ but
    # are unused in forward(); omitted.
    return p


# ----------------------------------------------------------------------------
# Pure-JAX references (validation only)
# ----------------------------------------------------------------------------
def _conv_ref(x, w_hwio, b, pad, operand_dtype=None):
    xc = x if operand_dtype is None else x.astype(operand_dtype)
    wc = w_hwio if operand_dtype is None else w_hwio.astype(operand_dtype)
    y = lax.conv_general_dilated(
        xc, wc, window_strides=(1, 1),
        padding=[(pad, pad), (pad, pad)],
        dimension_numbers=("NCHW", "HWIO", "NCHW"),
        preferred_element_type=jnp.float32,
        precision=lax.Precision.HIGHEST)
    if b is not None:
        bc = b if operand_dtype is None else b.astype(operand_dtype).astype(jnp.float32)
        y = y + bc.reshape(1, -1, 1, 1)
    return y


def _act_ref(v):
    return jnp.where(v >= 0, v, NEG_SLOPE * v)


def _forward_ref(x, p):
    """Full-f32 (HIGHEST precision) reference."""
    main = _act_ref(_conv_ref(x, p["tc1_w"], p["tc1_b"], 1))
    h = _act_ref(_conv_ref(x, p["rb1_w1"], p["rb1_b1"], 1))
    h = _conv_ref(h, p["rb1_w2"], p["rb1_b2"], 1)
    s = _conv_ref(x, p["rb1_ws"], p["rb1_bs"], 0)
    res = _act_ref(h + s)
    return res + main


def _forward_ref_bf16ops(x, p):
    """Reference with operands rounded exactly like the kernel's bf16 path
    (bf16 matmul operands, f32 accumulation, b2 folded into the skip bias).
    Used as a tight logic check: any indexing / mask / tap-order bug in the
    kernel produces O(0.1+) errors, far above this comparison's noise floor."""
    bf = jnp.bfloat16
    main = _act_ref(_conv_ref(x, p["tc1_w"], p["tc1_b"], 1, bf))
    h = _act_ref(_conv_ref(x, p["rb1_w1"], p["rb1_b1"], 1, bf))
    h = _conv_ref(h, p["rb1_w2"], None, 1, bf)                  # b2 folded below
    s = _conv_ref(x, p["rb1_ws"], p["rb1_bs"] + p["rb1_b2"], 0, bf)
    res = _act_ref(h + s)
    return res + main


# ----------------------------------------------------------------------------
if __name__ == "__main__":
    n_chan, chan_embed = 4, 24
    N, H, W = 2, 16, 16

    key = jax.random.PRNGKey(0)
    pkey, xkey = jax.random.split(key)
    params = init_params(pkey, n_chan, chan_embed)
    kparams = pack_params(params)                     # bf16 matmul operands
    x = jax.random.normal(xkey, (N, n_chan, H, W), jnp.float32)

    out = network_forward(x, kparams)
    jax.block_until_ready(out)
    assert out.shape == (N, chan_embed, H, W), out.shape

    # Loose sanity bound vs. the full-f32 reference (reflects bf16 operand
    # rounding of a two-layer conv stack; typical max-abs error ~5e-3..1e-2).
    ref_f32 = _forward_ref(x, params)
    err_f32 = float(jnp.max(jnp.abs(out - ref_f32)))
    assert err_f32 < 3e-2, f"kernel vs f32 reference: max abs err = {err_f32}"

    # Tight logic check vs. a numerics-matched reference (same bf16 operand
    # rounding, f32 accumulation); typical error ~1e-3, dominated by f32
    # accumulation-order / bf16 rounding-boundary noise — any mask/roll/tap
    # ordering bug would blow well past this bound.
    ref_bf = _forward_ref_bf16ops(x, params)
    err_bf = float(jnp.max(jnp.abs(out - ref_bf)))
    assert err_bf < 1e-2, f"kernel vs matched reference: max abs err = {err_bf}"

    print("KERNEL_OK")
</pallas_src>

<mosaic_0001>
module attributes {stable_mosaic.version = 11 : i64} {
  func.func @_fused_forward_kernel(%arg0: i32, %arg1: memref<1x8x256xf32, #tpu.memory_space<vmem>>, %arg2: memref<9x256xf32, #tpu.memory_space<vmem>>, %arg3: memref<72x72xbf16, #tpu.memory_space<vmem>>, %arg4: memref<9x24x24xbf16, #tpu.memory_space<vmem>>, %arg5: memref<1x24x256xf32, #tpu.memory_space<vmem>>) attributes {dimension_semantics = [#tpu.dimension_semantics<parallel>], iteration_bounds = array<i64: 2>, scalar_prefetch = 0 : i64, scratch_operands = 0 : i64, tpu.core_type = #tpu.core_type<tc>, window_params = [{transform_indices = @transform_0, window_bounds = array<i64: 1, 8, 256>}, {pipeline_mode = #tpu.pipeline_mode<synchronous>, transform_indices = @transform_1, window_bounds = array<i64: 9, 256>}, {pipeline_mode = #tpu.pipeline_mode<synchronous>, transform_indices = @transform_2, window_bounds = array<i64: 72, 72>}, {pipeline_mode = #tpu.pipeline_mode<synchronous>, transform_indices = @transform_3, window_bounds = array<i64: 9, 24, 24>}, {transform_indices = @transform_4, window_bounds = array<i64: 1, 24, 256>}]} {
    %c0 = arith.constant 0 : index
    %c0_0 = arith.constant 0 : index
    %c0_1 = arith.constant 0 : index
    %0 = vector.load %arg1[%c0, %c0_0, %c0_1] : memref<1x8x256xf32, #tpu.memory_space<vmem>>, vector<1x8x256xf32>
    %1 = vector.shape_cast %0 : vector<1x8x256xf32> to vector<8x256xf32>
    %c17_i32 = arith.constant 17 : i32
    %2 = tpu.dynamic_rotate %1 by %c17_i32 dim 1 : vector<8x256xf32>, i32 -> vector<8x256xf32>
    %c0_2 = arith.constant 0 : index
    %c0_3 = arith.constant 0 : index
    %3 = vector.load %arg2[%c0_2, %c0_3] : memref<9x256xf32, #tpu.memory_space<vmem>>, vector<1x256xf32>
    %4 = vector.broadcast %3 : vector<1x256xf32> to vector<8x256xf32>
    %5 = arith.mulf %2, %4 : vector<8x256xf32>
    %c16_i32 = arith.constant 16 : i32
    %6 = tpu.dynamic_rotate %1 by %c16_i32 dim 1 : vector<8x256xf32>, i32 -> vector<8x256xf32>
    %c1 = arith.constant 1 : index
    %c0_4 = arith.constant 0 : index
    %7 = vector.load %arg2[%c1, %c0_4] : memref<9x256xf32, #tpu.memory_space<vmem>>, vector<1x256xf32>
    %8 = vector.broadcast %7 : vector<1x256xf32> to vector<8x256xf32>
    %9 = arith.mulf %6, %8 : vector<8x256xf32>
    %c15_i32 = arith.constant 15 : i32
    %10 = tpu.dynamic_rotate %1 by %c15_i32 dim 1 : vector<8x256xf32>, i32 -> vector<8x256xf32>
    %c2 = arith.constant 2 : index
    %c0_5 = arith.constant 0 : index
    %11 = vector.load %arg2[%c2, %c0_5] : memref<9x256xf32, #tpu.memory_space<vmem>>, vector<1x256xf32>
    %12 = vector.broadcast %11 : vector<1x256xf32> to vector<8x256xf32>
    %13 = arith.mulf %10, %12 : vector<8x256xf32>
    %c1_i32 = arith.constant 1 : i32
    %14 = tpu.dynamic_rotate %1 by %c1_i32 dim 1 : vector<8x256xf32>, i32 -> vector<8x256xf32>
    %c3 = arith.constant 3 : index
    %c0_6 = arith.constant 0 : index
    %15 = vector.load %arg2[%c3, %c0_6] : memref<9x256xf32, #tpu.memory_space<vmem>>, vector<1x256xf32>
    %16 = vector.broadcast %15 : vector<1x256xf32> to vector<8x256xf32>
    %17 = arith.mulf %14, %16 : vector<8x256xf32>
    %c255_i32 = arith.constant 255 : i32
    %18 = tpu.dynamic_rotate %1 by %c255_i32 dim 1 : vector<8x256xf32>, i32 -> vector<8x256xf32>
    %c5 = arith.constant 5 : index
    %c0_7 = arith.constant 0 : index
    %19 = vector.load %arg2[%c5, %c0_7] : memref<9x256xf32, #tpu.memory_space<vmem>>, vector<1x256xf32>
    %20 = vector.broadcast %19 : vector<1x256xf32> to vector<8x256xf32>
    %21 = arith.mulf %18, %20 : vector<8x256xf32>
    %c241_i32 = arith.constant 241 : i32
    %22 = tpu.dynamic_rotate %1 by %c241_i32 dim 1 : vector<8x256xf32>, i32 -> vector<8x256xf32>
    %c6 = arith.constant 6 : index
    %c0_8 = arith.constant 0 : index
    %23 = vector.load %arg2[%c6, %c0_8] : memref<9x256xf32, #tpu.memory_space<vmem>>, vector<1x256xf32>
    %24 = vector.broadcast %23 : vector<1x256xf32> to vector<8x256xf32>
    %25 = arith.mulf %22, %24 : vector<8x256xf32>
    %c240_i32 = arith.constant 240 : i32
    %26 = tpu.dynamic_rotate %1 by %c240_i32 dim 1 : vector<8x256xf32>, i32 -> vector<8x256xf32>
    %c7 = arith.constant 7 : index
    %c0_9 = arith.constant 0 : index
    %27 = vector.load %arg2[%c7, %c0_9] : memref<9x256xf32, #tpu.memory_space<vmem>>, vector<1x256xf32>
    %28 = vector.broadcast %27 : vector<1x256xf32> to vector<8x256xf32>
    %29 = arith.mulf %26, %28 : vector<8x256xf32>
    %c239_i32 = arith.constant 239 : i32
    %30 = tpu.dynamic_rotate %1 by %c239_i32 dim 1 : vector<8x256xf32>, i32 -> vector<8x256xf32>
    %c8 = arith.constant 8 : index
    %c0_10 = arith.constant 0 : index
    %31 = vector.load %arg2[%c8, %c0_10] : memref<9x256xf32, #tpu.memory_space<vmem>>, vector<1x256xf32>
    %32 = vector.broadcast %31 : vector<1x256xf32> to vector<8x256xf32>
    %33 = arith.mulf %30, %32 : vector<8x256xf32>
    %34 = tpu.concatenate %5, %9, %13, %17, %1, %21, %25, %29, %33 in 0 : vector<8x256xf32>, vector<8x256xf32>, vector<8x256xf32>, vector<8x256xf32>, vector<8x256xf32>, vector<8x256xf32>, vector<8x256xf32>, vector<8x256xf32>, vector<8x256xf32> -> vector<72x256xf32>
    %35 = arith.truncf %34 : vector<72x256xf32> to vector<72x256xbf16>
    %c0_11 = arith.constant 0 : index
    %c0_12 = arith.constant 0 : index
    %36 = vector.load %arg3[%c0_11, %c0_12] : memref<72x72xbf16, #tpu.memory_space<vmem>>, vector<72x72xbf16>
    %cst = arith.constant dense<0.000000e+00> : vector<72x256xf32>
    %37 = tpu.matmul %36, %35, %cst {dimension_numbers = #tpu.dot_dimension_numbers<[1], [0], [0], [1], [0, 0, 1, 1], [], []>} : vector<72x72xbf16>, vector<72x256xbf16>, vector<72x256xf32> -> vector<72x256xf32>
    %38 = vector.extract_strided_slice %37 {offsets = [0, 0], sizes = [24, 256], strides = [1, 1]} : vector<72x256xf32> to vector<24x256xf32>
    %cst_13 = arith.constant 2.000000e-01 : f32
    %39 = vector.broadcast %cst_13 : f32 to vector<24x256xf32>
    %40 = arith.mulf %39, %38 : vector<24x256xf32>
    %41 = arith.maximumf %38, %40 : vector<24x256xf32>
    %42 = vector.extract_strided_slice %37 {offsets = [24, 0], sizes = [24, 256], strides = [1, 1]} : vector<72x256xf32> to vector<24x256xf32>
    %cst_14 = arith.constant 2.000000e-01 : f32
    %43 = vector.broadcast %cst_14 : f32 to vector<24x256xf32>
    %44 = arith.mulf %43, %42 : vector<24x256xf32>
    %45 = arith.maximumf %42, %44 : vector<24x256xf32>
    %46 = vector.extract_strided_slice %37 {offsets = [48, 0], sizes = [24, 256], strides = [1, 1]} : vector<72x256xf32> to vector<24x256xf32>
    %c17_i32_15 = arith.constant 17 : i32
    %47 = tpu.dynamic_rotate %45 by %c17_i32_15 dim 1 : vector<24x256xf32>, i32 -> vector<24x256xf32>
    %c0_16 = arith.constant 0 : index
    %c0_17 = arith.constant 0 : index
    %48 = vector.load %arg2[%c0_16, %c0_17] : memref<9x256xf32, #tpu.memory_space<vmem>>, vector<1x256xf32>
    %49 = vector.broadcast %48 : vector<1x256xf32> to vector<24x256xf32>
    %50 = arith.mulf %47, %49 : vector<24x256xf32>
    %c0_18 = arith.constant 0 : index
    %c0_19 = arith.constant 0 : index
    %c0_20 = arith.constant 0 : index
    %51 = vector.load %arg4[%c0_18, %c0_19, %c0_20] : memref<9x24x24xbf16, #tpu.memory_space<vmem>>, vector<1x24x24xbf16>
    %52 = vector.shape_cast %51 : vector<1x24x24xbf16> to vector<24x24xbf16>
    %53 = arith.truncf %50 : vector<24x256xf32> to vector<24x256xbf16>
    %cst_21 = arith.constant dense<0.000000e+00> : vector<24x256xf32>
    %54 = tpu.matmul %52, %53, %cst_21 {dimension_numbers = #tpu.dot_dimension_numbers<[1], [0], [0], [1], [0, 0, 1, 1], [], []>} : vector<24x24xbf16>, vector<24x256xbf16>, vector<24x256xf32> -> vector<24x256xf32>
    %55 = arith.addf %46, %54 : vector<24x256xf32>
    %c16_i32_22 = arith.constant 16 : i32
    %56 = tpu.dynamic_rotate %45 by %c16_i32_22 dim 1 : vector<24x256xf32>, i32 -> vector<24x256xf32>
    %c1_23 = arith.constant 1 : index
    %c0_24 = arith.constant 0 : index
    %57 = vector.load %arg2[%c1_23, %c0_24] : memref<9x256xf32, #tpu.memory_space<vmem>>, vector<1x256xf32>
    %58 = vector.broadcast %57 : vector<1x256xf32> to vector<24x256xf32>
    %59 = arith.mulf %56, %58 : vector<24x256xf32>
    %c1_25 = arith.constant 1 : index
    %c0_26 = arith.constant 0 : index
    %c0_27 = arith.constant 0 : index
    %60 = vector.load %arg4[%c1_25, %c0_26, %c0_27] : memref<9x24x24xbf16, #tpu.memory_space<vmem>>, vector<1x24x24xbf16>
    %61 = vector.shape_cast %60 : vector<1x24x24xbf16> to vector<24x24xbf16>
    %62 = arith.truncf %59 : vector<24x256xf32> to vector<24x256xbf16>
    %cst_28 = arith.constant dense<0.000000e+00> : vector<24x256xf32>
    %63 = tpu.matmul %61, %62, %cst_28 {dimension_numbers = #tpu.dot_dimension_numbers<[1], [0], [0], [1], [0, 0, 1, 1], [], []>} : vector<24x24xbf16>, vector<24x256xbf16>, vector<24x256xf32> -> vector<24x256xf32>
    %64 = arith.addf %55, %63 : vector<24x256xf32>
    %c15_i32_29 = arith.constant 15 : i32
    %65 = tpu.dynamic_rotate %45 by %c15_i32_29 dim 1 : vector<24x256xf32>, i32 -> vector<24x256xf32>
    %c2_30 = arith.constant 2 : index
    %c0_31 = arith.constant 0 : index
    %66 = vector.load %arg2[%c2_30, %c0_31] : memref<9x256xf32, #tpu.memory_space<vmem>>, vector<1x256xf32>
    %67 = vector.broadcast %66 : vector<1x256xf32> to vector<24x256xf32>
    %68 = arith.mulf %65, %67 : vector<24x256xf32>
    %c2_32 = arith.constant 2 : index
    %c0_33 = arith.constant 0 : index
    %c0_34 = arith.constant 0 : index
    %69 = vector.load %arg4[%c2_32, %c0_33, %c0_34] : memref<9x24x24xbf16, #tpu.memory_space<vmem>>, vector<1x24x24xbf16>
    %70 = vector.shape_cast %69 : vector<1x24x24xbf16> to vector<24x24xbf16>
    %71 = arith.truncf %68 : vector<24x256xf32> to vector<24x256xbf16>
    %cst_35 = arith.constant dense<0.000000e+00> : vector<24x256xf32>
    %72 = tpu.matmul %70, %71, %cst_35 {dimension_numbers = #tpu.dot_dimension_numbers<[1], [0], [0], [1], [0, 0, 1, 1], [], []>} : vector<24x24xbf16>, vector<24x256xbf16>, vector<24x256xf32> -> vector<24x256xf32>
    %73 = arith.addf %64, %72 : vector<24x256xf32>
    %c1_i32_36 = arith.constant 1 : i32
    %74 = tpu.dynamic_rotate %45 by %c1_i32_36 dim 1 : vector<24x256xf32>, i32 -> vector<24x256xf32>
    %c3_37 = arith.constant 3 : index
    %c0_38 = arith.constant 0 : index
    %75 = vector.load %arg2[%c3_37, %c0_38] : memref<9x256xf32, #tpu.memory_space<vmem>>, vector<1x256xf32>
    %76 = vector.broadcast %75 : vector<1x256xf32> to vector<24x256xf32>
    %77 = arith.mulf %74, %76 : vector<24x256xf32>
    %c3_39 = arith.constant 3 : index
    %c0_40 = arith.constant 0 : index
    %c0_41 = arith.constant 0 : index
    %78 = vector.load %arg4[%c3_39, %c0_40, %c0_41] : memref<9x24x24xbf16, #tpu.memory_space<vmem>>, vector<1x24x24xbf16>
    %79 = vector.shape_cast %78 : vector<1x24x24xbf16> to vector<24x24xbf16>
    %80 = arith.truncf %77 : vector<24x256xf32> to vector<24x256xbf16>
    %cst_42 = arith.constant dense<0.000000e+00> : vector<24x256xf32>
    %81 = tpu.matmul %79, %80, %cst_42 {dimension_numbers = #tpu.dot_dimension_numbers<[1], [0], [0], [1], [0, 0, 1, 1], [], []>} : vector<24x24xbf16>, vector<24x256xbf16>, vector<24x256xf32> -> vector<24x256xf32>
    %82 = arith.addf %73, %81 : vector<24x256xf32>
    %c4 = arith.constant 4 : index
    %c0_43 = arith.constant 0 : index
    %c0_44 = arith.constant 0 : index
    %83 = vector.load %arg4[%c4, %c0_43, %c0_44] : memref<9x24x24xbf16, #tpu.memory_space<vmem>>, vector<1x24x24xbf16>
    %84 = vector.shape_cast %83 : vector<1x24x24xbf16> to vector<24x24xbf16>
    %85 = arith.truncf %45 : vector<24x256xf32> to vector<24x256xbf16>
    %cst_45 = arith.constant dense<0.000000e+00> : vector<24x256xf32>
    %86 = tpu.matmul %84, %85, %cst_45 {dimension_numbers = #tpu.dot_dimension_numbers<[1], [0], [0], [1], [0, 0, 1, 1], [], []>} : vector<24x24xbf16>, vector<24x256xbf16>, vector<24x256xf32> -> vector<24x256xf32>
    %87 = arith.addf %82, %86 : vector<24x256xf32>
    %c255_i32_46 = arith.constant 255 : i32
    %88 = tpu.dynamic_rotate %45 by %c255_i32_46 dim 1 : vector<24x256xf32>, i32 -> vector<24x256xf32>
    %c5_47 = arith.constant 5 : index
    %c0_48 = arith.constant 0 : index
    %89 = vector.load %arg2[%c5_47, %c0_48] : memref<9x256xf32, #tpu.memory_space<vmem>>, vector<1x256xf32>
    %90 = vector.broadcast %89 : vector<1x256xf32> to vector<24x256xf32>
    %91 = arith.mulf %88, %90 : vector<24x256xf32>
    %c5_49 = arith.constant 5 : index
    %c0_50 = arith.constant 0 : index
    %c0_51 = arith.constant 0 : index
    %92 = vector.load %arg4[%c5_49, %c0_50, %c0_51] : memref<9x24x24xbf16, #tpu.memory_space<vmem>>, vector<1x24x24xbf16>
    %93 = vector.shape_cast %92 : vector<1x24x24xbf16> to vector<24x24xbf16>
    %94 = arith.truncf %91 : vector<24x256xf32> to vector<24x256xbf16>
    %cst_52 = arith.constant dense<0.000000e+00> : vector<24x256xf32>
    %95 = tpu.matmul %93, %94, %cst_52 {dimension_numbers = #tpu.dot_dimension_numbers<[1], [0], [0], [1], [0, 0, 1, 1], [], []>} : vector<24x24xbf16>, vector<24x256xbf16>, vector<24x256xf32> -> vector<24x256xf32>
    %96 = arith.addf %87, %95 : vector<24x256xf32>
    %c241_i32_53 = arith.constant 241 : i32
    %97 = tpu.dynamic_rotate %45 by %c241_i32_53 dim 1 : vector<24x256xf32>, i32 -> vector<24x256xf32>
    %c6_54 = arith.constant 6 : index
    %c0_55 = arith.constant 0 : index
    %98 = vector.load %arg2[%c6_54, %c0_55] : memref<9x256xf32, #tpu.memory_space<vmem>>, vector<1x256xf32>
    %99 = vector.broadcast %98 : vector<1x256xf32> to vector<24x256xf32>
    %100 = arith.mulf %97, %99 : vector<24x256xf32>
    %c6_56 = arith.constant 6 : index
    %c0_57 = arith.constant 0 : index
    %c0_58 = arith.constant 0 : index
    %101 = vector.load %arg4[%c6_56, %c0_57, %c0_58] : memref<9x24x24xbf16, #tpu.memory_space<vmem>>, vector<1x24x24xbf16>
    %102 = vector.shape_cast %101 : vector<1x24x24xbf16> to vector<24x24xbf16>
    %103 = arith.truncf %100 : vector<24x256xf32> to vector<24x256xbf16>
    %cst_59 = arith.constant dense<0.000000e+00> : vector<24x256xf32>
    %104 = tpu.matmul %102, %103, %cst_59 {dimension_numbers = #tpu.dot_dimension_numbers<[1], [0], [0], [1], [0, 0, 1, 1], [], []>} : vector<24x24xbf16>, vector<24x256xbf16>, vector<24x256xf32> -> vector<24x256xf32>
    %105 = arith.addf %96, %104 : vector<24x256xf32>
    %c240_i32_60 = arith.constant 240 : i32
    %106 = tpu.dynamic_rotate %45 by %c240_i32_60 dim 1 : vector<24x256xf32>, i32 -> vector<24x256xf32>
    %c7_61 = arith.constant 7 : index
    %c0_62 = arith.constant 0 : index
    %107 = vector.load %arg2[%c7_61, %c0_62] : memref<9x256xf32, #tpu.memory_space<vmem>>, vector<1x256xf32>
    %108 = vector.broadcast %107 : vector<1x256xf32> to vector<24x256xf32>
    %109 = arith.mulf %106, %108 : vector<24x256xf32>
    %c7_63 = arith.constant 7 : index
    %c0_64 = arith.constant 0 : index
    %c0_65 = arith.constant 0 : index
    %110 = vector.load %arg4[%c7_63, %c0_64, %c0_65] : memref<9x24x24xbf16, #tpu.memory_space<vmem>>, vector<1x24x24xbf16>
    %111 = vector.shape_cast %110 : vector<1x24x24xbf16> to vector<24x24xbf16>
    %112 = arith.truncf %109 : vector<24x256xf32> to vector<24x256xbf16>
    %cst_66 = arith.constant dense<0.000000e+00> : vector<24x256xf32>
    %113 = tpu.matmul %111, %112, %cst_66 {dimension_numbers = #tpu.dot_dimension_numbers<[1], [0], [0], [1], [0, 0, 1, 1], [], []>} : vector<24x24xbf16>, vector<24x256xbf16>, vector<24x256xf32> -> vector<24x256xf32>
    %114 = arith.addf %105, %113 : vector<24x256xf32>
    %c239_i32_67 = arith.constant 239 : i32
    %115 = tpu.dynamic_rotate %45 by %c239_i32_67 dim 1 : vector<24x256xf32>, i32 -> vector<24x256xf32>
    %c8_68 = arith.constant 8 : index
    %c0_69 = arith.constant 0 : index
    %116 = vector.load %arg2[%c8_68, %c0_69] : memref<9x256xf32, #tpu.memory_space<vmem>>, vector<1x256xf32>
    %117 = vector.broadcast %116 : vector<1x256xf32> to vector<24x256xf32>
    %118 = arith.mulf %115, %117 : vector<24x256xf32>
    %c8_70 = arith.constant 8 : index
    %c0_71 = arith.constant 0 : index
    %c0_72 = arith.constant 0 : index
    %119 = vector.load %arg4[%c8_70, %c0_71, %c0_72] : memref<9x24x24xbf16, #tpu.memory_space<vmem>>, vector<1x24x24xbf16>
    %120 = vector.shape_cast %119 : vector<1x24x24xbf16> to vector<24x24xbf16>
    %121 = arith.truncf %118 : vector<24x256xf32> to vector<24x256xbf16>
    %cst_73 = arith.constant dense<0.000000e+00> : vector<24x256xf32>
    %122 = tpu.matmul %120, %121, %cst_73 {dimension_numbers = #tpu.dot_dimension_numbers<[1], [0], [0], [1], [0, 0, 1, 1], [], []>} : vector<24x24xbf16>, vector<24x256xbf16>, vector<24x256xf32> -> vector<24x256xf32>
    %123 = arith.addf %114, %122 : vector<24x256xf32>
    %cst_74 = arith.constant 2.000000e-01 : f32
    %124 = vector.broadcast %cst_74 : f32 to vector<24x256xf32>
    %125 = arith.mulf %124, %123 : vector<24x256xf32>
    %126 = arith.maximumf %123, %125 : vector<24x256xf32>
    %127 = arith.addf %126, %41 : vector<24x256xf32>
    %c0_75 = arith.constant 0 : index
    %c0_76 = arith.constant 0 : index
    %c0_77 = arith.constant 0 : index
    %128 = vector.load %arg5[%c0_75, %c0_76, %c0_77] : memref<1x24x256xf32, #tpu.memory_space<vmem>>, vector<1x24x256xf32>
    %129 = vector.shape_cast %128 : vector<1x24x256xf32> to vector<24x256xf32>
    %130 = vector.shape_cast %127 : vector<24x256xf32> to vector<1x24x256xf32>
    tpu.vector_store %arg5[%c0_75, %c0_76, %c0_77], %130 {strides = array<i32>} : memref<1x24x256xf32, #tpu.memory_space<vmem>>, vector<1x24x256xf32>,
    return
  }
  func.func @transform_0(%arg0: i32) -> (i32, i32, i32) {
    %c0_i32 = arith.constant 0 : i32
    %c0_i32_0 = arith.constant 0 : i32
    %c0_i32_1 = arith.constant 0 : i32
    return %arg0, %c0_i32, %c0_i32_0 : i32, i32, i32
  }
  func.func @transform_1(%arg0: i32) -> (i32, i32) {
    %c0_i32 = arith.constant 0 : i32
    %c0_i32_0 = arith.constant 0 : i32
    %c0_i32_1 = arith.constant 0 : i32
    return %c0_i32, %c0_i32_0 : i32, i32
  }
  func.func @transform_2(%arg0: i32) -> (i32, i32) {
    %c0_i32 = arith.constant 0 : i32
    %c0_i32_0 = arith.constant 0 : i32
    %c0_i32_1 = arith.constant 0 : i32
    return %c0_i32, %c0_i32_0 : i32, i32
  }
  func.func @transform_3(%arg0: i32) -> (i32, i32, i32) {
    %c0_i32 = arith.constant 0 : i32
    %c0_i32_0 = arith.constant 0 : i32
    %c0_i32_1 = arith.constant 0 : i32
    %c0_i32_2 = arith.constant 0 : i32
    return %c0_i32, %c0_i32_0, %c0_i32_1 : i32, i32, i32
  }
  func.func @transform_4(%arg0: i32) -> (i32, i32, i32) {
    %c0_i32 = arith.constant 0 : i32
    %c0_i32_0 = arith.constant 0 : i32
    %c0_i32_1 = arith.constant 0 : i32
    return %arg0, %c0_i32, %c0_i32_0 : i32, i32, i32
  }
}

</mosaic_0001>

<llo_original>
// kernel: network_forward.1
$region0: #{network_forward.1}
  #allocation0 [shape = 'u32[]', space=smem, size = 0x4, offset = 0x4, fixed_abs, tag = 'smem constant byte address 0x4 - core index']
  #allocation1 [shape = 'u32[144,128]{1,0:T(1,128)}', space=vmem, size = 0x12000, scoped, tag = 'internal scratch']
  %s0 = inlined_call_operand.vmem [shape: f32[2,8,256], index: 0, kind: input, shape index: {}]
  %s1 = inlined_call_operand.vmem [shape: f32[9,256], index: 1, kind: input, shape index: {}]
  %s2 = inlined_call_operand.vmem [shape: bf16[72,72], index: 2, kind: input, shape index: {}]
  %s3 = inlined_call_operand.vmem [shape: bf16[9,24,24], index: 3, kind: input, shape index: {}]
  %s4 = inlined_call_operand.vmem [shape: f32[2,24,256], index: 4, kind: output, shape index: {}]
  %s5 = sld [smem:[#allocation0]]
  $region49: #{network_forward.1} parent=0
    _
  %s7 = ssub.s32 1, %s5
  %s8 = scalar_select 0, %s7, %s5
  loop: start=0, step=1, limit=4
  $region2: #{network_forward.1} parent=0 // loop_pre_header
    _
  $region3: #{network_forward.1} parent=0 // loop_header
    %s10 = sphi 0, %s14
    %p11 = scmp.ge.s32.totalorder %s10, 4
    %s20 = sphi 0, %s22
    %s23 = sphi 0, %s20
    %s24 = sphi 0, %s23
    %s40 = sphi 0, %s24
    %s44 = sphi 0, %s44
    %s46 = sphi 0, %s44
    %s47 = sphi 0, %s46
    %s61 = sphi 0, %s47
    %s65 = sphi 0, %s65
    %s67 = sphi 0, %s65
    %s68 = sphi 0, %s67
    %s82 = sphi 0, %s68
    %s86 = sphi 0, %s86
    %s88 = sphi 0, %s86
    %s89 = sphi 0, %s88
    %s103 = sphi 0, %s89
    %s109 = sphi 0, %s111
    %s112 = sphi 0, %s109
    %s113 = sphi 0, %s112
    %s129 = sphi 0, %s113
  $region4: #{network_forward.1} parent=0 // loop_header_branch
    %13 = sbr.rel (%p11) target = $region8
  $region5: #{network_forward.1} parent=0 // loop_body
    %s15 = ssub.s32 %s10, 1
    %s16 = ssub.s32 %s10, 2
    %s17 = sadd.s32 %s10, 1
    %s18 = ssub.s32 %s10, %s17
    %p19 = scmp.eq.s32.totalorder %s18, 0
    %s21 = sadd.s32 %s20, 1
    %s22 = scalar_select %p19, %s20, %s21
    %p25 = pneg %p19
    %p26 = scmp.eq.s32.totalorder %s10, 1
    %p27 = por %p25, %p26
    %p28 = scmp.ne.s32.totalorder %s20, %s23
    %p29 = scmp.eq.s32.totalorder %s10, 0
    %p30 = por %p28, %p29
    %p31 = scmp.ne.s32.totalorder %s20, %s23
    %p32 = scmp.eq.s32.totalorder %s15, 1
    %p33 = por %p31, %p32
    %p34 = scmp.ne.s32.totalorder %s23, %s24
    %p35 = scmp.eq.s32.totalorder %s15, 0
    %p36 = por %p34, %p35
    %p37 = scmp.ne.s32.totalorder %s23, %s24
    %p38 = scmp.eq.s32.totalorder %s16, 1
    %p39 = por %p37, %p38
    %p41 = scmp.ne.s32.totalorder %s24, %s40
    %p42 = scmp.eq.s32.totalorder %s16, 0
    %p43 = por %p41, %p42
    %s45 = sadd.s32 %s44, 1
    %p48 = scmp.eq.s32.totalorder %s10, 1
    %p49 = scmp.ne.s32.totalorder %s44, %s46
    %p50 = scmp.eq.s32.totalorder %s10, 0
    %p51 = por %p49, %p50
    %p52 = scmp.ne.s32.totalorder %s44, %s46
    %p53 = scmp.eq.s32.totalorder %s15, 1
    %p54 = por %p52, %p53
    %p55 = scmp.ne.s32.totalorder %s46, %s47
    %p56 = scmp.eq.s32.totalorder %s15, 0
    %p57 = por %p55, %p56
    %p58 = scmp.ne.s32.totalorder %s46, %s47
    %p59 = scmp.eq.s32.totalorder %s16, 1
    %p60 = por %p58, %p59
    %p62 = scmp.ne.s32.totalorder %s47, %s61
    %p63 = scmp.eq.s32.totalorder %s16, 0
    %p64 = por %p62, %p63
    %s66 = sadd.s32 %s65, 1
    %p69 = scmp.eq.s32.totalorder %s10, 1
    %p70 = scmp.ne.s32.totalorder %s65, %s67
    %p71 = scmp.eq.s32.totalorder %s10, 0
    %p72 = por %p70, %p71
    %p73 = scmp.ne.s32.totalorder %s65, %s67
    %p74 = scmp.eq.s32.totalorder %s15, 1
    %p75 = por %p73, %p74
    %p76 = scmp.ne.s32.totalorder %s67, %s68
    %p77 = scmp.eq.s32.totalorder %s15, 0
    %p78 = por %p76, %p77
    %p79 = scmp.ne.s32.totalorder %s67, %s68
    %p80 = scmp.eq.s32.totalorder %s16, 1
    %p81 = por %p79, %p80
    %p83 = scmp.ne.s32.totalorder %s68, %s82
    %p84 = scmp.eq.s32.totalorder %s16, 0
    %p85 = por %p83, %p84
    %s87 = sadd.s32 %s86, 1
    %p90 = scmp.eq.s32.totalorder %s10, 1
    %p91 = scmp.ne.s32.totalorder %s86, %s88
    %p92 = scmp.eq.s32.totalorder %s10, 0
    %p93 = por %p91, %p92
    %p94 = scmp.ne.s32.totalorder %s86, %s88
    %p95 = scmp.eq.s32.totalorder %s15, 1
    %p96 = por %p94, %p95
    %p97 = scmp.ne.s32.totalorder %s88, %s89
    %p98 = scmp.eq.s32.totalorder %s15, 0
    %p99 = por %p97, %p98
    %p100 = scmp.ne.s32.totalorder %s88, %s89
    %p101 = scmp.eq.s32.totalorder %s16, 1
    %p102 = por %p100, %p101
    %p104 = scmp.ne.s32.totalorder %s89, %s103
    %p105 = scmp.eq.s32.totalorder %s16, 0
    %p106 = por %p104, %p105
    %s107 = ssub.s32 %s10, %s17
    %p108 = scmp.eq.s32.totalorder %s107, 0
    %s110 = sadd.s32 %s109, 1
    %s111 = scalar_select %p108, %s109, %s110
    %p114 = pneg %p108
    %p115 = scmp.eq.s32.totalorder %s10, 1
    %p116 = por %p114, %p115
    %p117 = scmp.ne.s32.totalorder %s109, %s112
    %p118 = scmp.eq.s32.totalorder %s10, 0
    %p119 = por %p117, %p118
    %p120 = scmp.ne.s32.totalorder %s109, %s112
    %p121 = scmp.eq.s32.totalorder %s15, 1
    %p122 = por %p120, %p121
    %p123 = scmp.ne.s32.totalorder %s112, %s113
    %p124 = scmp.eq.s32.totalorder %s15, 0
    %p125 = por %p123, %p124
    %p126 = scmp.ne.s32.totalorder %s112, %s113
    %p127 = scmp.eq.s32.totalorder %s16, 1
    %p128 = por %p126, %p127
    %p130 = scmp.ne.s32.totalorder %s113, %s129
    %p131 = scmp.eq.s32.totalorder %s16, 0
    %p132 = por %p130, %p131
    %p133 = scmp.le.s32.totalorder 1, %s10
    %p134 = scmp.lt.s32.totalorder %s10, 3
    %p135 = pnand %p133, %p134
    %p136 = pneg %p135
    // Predicated region
    $region9: #{network_forward.1} parent=5 // pred_check
      _
    $region10: #{network_forward.1} parent=5 // pred_check_branch
      %138 = sbr.rel (%p135) target = $region12
    $region11: #{network_forward.1} parent=5 // pred_region
      %s139 = ssub.s32 %s10, 1
      // Predicated region
      $region13: #{network_forward.1} parent=11 // pred_check
        %p140 = pneg %p57
      $region14: #{network_forward.1} parent=11 // pred_check_branch
        %142 = sbr.rel (%p140) target = $region16
      $region15: #{network_forward.1} parent=11 // pred_region
        _
      $region16: #{network_forward.1} parent=11 // pred_fallthru
        _
      // Predicated region
      $region17: #{network_forward.1} parent=11 // pred_check
        %p143 = pneg %p78
      $region18: #{network_forward.1} parent=11 // pred_check_branch
        %145 = sbr.rel (%p143) target = $region20
      $region19: #{network_forward.1} parent=11 // pred_region
        _
      $region20: #{network_forward.1} parent=11 // pred_fallthru
        _
      // Predicated region
      $region21: #{network_forward.1} parent=11 // pred_check
        %p146 = pneg %p99
      $region22: #{network_forward.1} parent=11 // pred_check_branch
        %148 = sbr.rel (%p146) target = $region24
      $region23: #{network_forward.1} parent=11 // pred_region
        _
      $region24: #{network_forward.1} parent=11 // pred_fallthru
        _
    $region12: #{network_forward.1} parent=5 // pred_fallthru
      _
    %p149 = scmp.lt.s32.totalorder %s10, 2
    // Predicated region
    $region25: #{network_forward.1} parent=5 // pred_check
      %p150 = pneg %p149
    $region26: #{network_forward.1} parent=5 // pred_check_branch
      %152 = sbr.rel (%p150) target = $region28
    $region27: #{network_forward.1} parent=5 // pred_region
      // Predicated region
      $region29: #{network_forward.1} parent=27 // pred_check
        %p153 = pneg %p30
      $region30: #{network_forward.1} parent=27 // pred_check_branch
        %155 = sbr.rel (%p153) target = $region32
      $region31: #{network_forward.1} parent=27 // pred_region
        %p156 = scmp.lt.s32.totalorder %s10, 1
        %s157 = scalar_select %p156, %s10, 1
        %s158 = smul.addr %s157, 2
        %s159 = smul.addr %s158, 8
        %s160 = scalar_lea.vmem %s0, %s159
      $region32: #{network_forward.1} parent=27 // pred_fallthru
        _
    $region28: #{network_forward.1} parent=5 // pred_fallthru
      _
    %p161 = scmp.le.s32.totalorder 1, %s10
    %p162 = scmp.lt.s32.totalorder %s10, 3
    %p163 = pnand %p161, %p162
    %p164 = pneg %p163
    // Predicated region
    $region33: #{network_forward.1} parent=5 // pred_check
      _
    $region34: #{network_forward.1} parent=5 // pred_check_branch
      %166 = sbr.rel (%p163) target = $region36
    $region35: #{network_forward.1} parent=5 // pred_region
      %s167 = ssub.s32 %s10, 1
      %p168 = scmp.lt.s32.totalorder %s15, 1
      %s169 = scalar_select %p168, %s15, 1
      %s170 = smul.addr %s169, 2
      %s171 = smul.addr %s170, 8
      %s172 = scalar_lea.vmem %s0, %s171
      %p173 = pneg %p36
      %p174 = pneg %p33
      %p175 = pneg %p57
      %p176 = pneg %p54
      %p177 = pneg %p78
      %p178 = pneg %p75
      %p179 = pneg %p99
      %p180 = pneg %p96
      %p181 = pneg %p125
      %p182 = pneg %p122
      %p183 = scmp.lt.s32.totalorder %s15, 1
      %s184 = scalar_select %p183, %s15, 1
      %s185 = smul.addr %s184, 6
      %s186 = smul.addr %s185, 8
      %s187 = scalar_lea.vmem %s4, %s186
      %p188 = scmp.lt.s32.totalorder %s15, 1
      %s189 = scalar_select %p188, %s15, 1
      %s190 = smul.addr %s189, 2
      %s191 = smul.addr %s190, 8
      %s192 = scalar_lea.vmem %s0, %s191
      %p193 = scmp.lt.s32.totalorder %s15, 1
      %s194 = scalar_select %p193, %s15, 1
      %s195 = smul.addr %s194, 6
      %s196 = smul.addr %s195, 8
      %s197 = scalar_lea.vmem %s4, %s196
      %v199 = vld [vmem:[%s192] sm:$0xff]
      %v200 = vld [vmem:[%s192 + $0x8] sm:$0xff]
      %201 = vrot.lane.b32.xlu0 %v199, 17
      %v202 = vpop.permute.xlu0 %201
      %203 = vrot.lane.b32.xlu0 %v200, 17
      %v204 = vpop.permute.xlu0 %203
      %v205 = vlaneseq
      %v206 = vand.u32 %v205, 127
      %vm207 = vcmp.lt.s32.totalorder %v206, 17
      %v208 = vsel %vm207, %v202, %v204
      %v209 = vsel %vm207, %v204, %v202
      %v210 = vld [vmem:[%s1] ss:$8 sm:$0x3]
      %v212 = vlaneseq
      %v213 = vshrl.u32 %v212, 7
      %v214 = vsub.s32 0, %v213
      %v215 = vrot.slane %v210, %v214
      %v216 = vlaneseq
      %v217 = vshrl.u32 %v216, 7
      %v218 = vsub.s32 1, %v217
      %v219 = vrot.slane %v210, %v218
      %v222 = vmul.f32 %v209, %v215
      %v223 = vmul.f32 %v208, %v219
      %224 = vrot.lane.b32.xlu0 %v199, 16
      %v225 = vpop.permute.xlu0 %224
      %226 = vrot.lane.b32.xlu0 %v200, 16
      %v227 = vpop.permute.xlu0 %226
      %vm228 = vcmp.lt.s32.totalorder %v206, 16
      %v229 = vsel %vm228, %v225, %v227
      %v230 = vsel %vm228, %v227, %v225
      %s231 = scalar_lea.vmem %s1, 1
      %v232 = vld [vmem:[%s231] ss:$8 sm:$0x3]
      %v234 = vlaneseq
      %v235 = vshrl.u32 %v234, 7
      %v236 = vsub.s32 0, %v235
      %v237 = vrot.slane %v232, %v236
      %v238 = vlaneseq
      %v239 = vshrl.u32 %v238, 7
      %v240 = vsub.s32 1, %v239
      %v241 = vrot.slane %v232, %v240
      %v244 = vmul.f32 %v230, %v237
      %v245 = vmul.f32 %v229, %v241
      %246 = vrot.lane.b32.xlu0 %v199, 15
      %v247 = vpop.permute.xlu0 %246
      %248 = vrot.lane.b32.xlu0 %v200, 15
      %v249 = vpop.permute.xlu0 %248
      %vm250 = vcmp.lt.s32.totalorder %v206, 15
      %v251 = vsel %vm250, %v247, %v249
      %v252 = vsel %vm250, %v249, %v247
      %s253 = scalar_lea.vmem %s1, 2
      %v254 = vld [vmem:[%s253] ss:$8 sm:$0x3]
      %v256 = vlaneseq
      %v257 = vshrl.u32 %v256, 7
      %v258 = vsub.s32 0, %v257
      %v259 = vrot.slane %v254, %v258
      %v260 = vlaneseq
      %v261 = vshrl.u32 %v260, 7
      %v262 = vsub.s32 1, %v261
      %v263 = vrot.slane %v254, %v262
      %v266 = vmul.f32 %v252, %v259
      %v267 = vmul.f32 %v251, %v263
      %268 = vrot.lane.b32.xlu0 %v199, 1
      %v269 = vpop.permute.xlu0 %268
      %270 = vrot.lane.b32.xlu0 %v200, 1
      %v271 = vpop.permute.xlu0 %270
      %vm272 = vcmp.lt.s32.totalorder %v206, 1
      %v273 = vsel %vm272, %v269, %v271
      %v274 = vsel %vm272, %v271, %v269
      %s275 = scalar_lea.vmem %s1, 3
      %v276 = vld [vmem:[%s275] ss:$8 sm:$0x3]
      %v278 = vlaneseq
      %v279 = vshrl.u32 %v278, 7
      %v280 = vsub.s32 0, %v279
      %v281 = vrot.slane %v276, %v280
      %v282 = vlaneseq
      %v283 = vshrl.u32 %v282, 7
      %v284 = vsub.s32 1, %v283
      %v285 = vrot.slane %v276, %v284
      %v288 = vmul.f32 %v274, %v281
      %v289 = vmul.f32 %v273, %v285
      %290 = vrot.lane.b32.xlu0 %v199, 127
      %v291 = vpop.permute.xlu0 %290
      %292 = vrot.lane.b32.xlu0 %v200, 127
      %v293 = vpop.permute.xlu0 %292
      %vm294 = vcmp.lt.s32.totalorder %v206, 127
      %v295 = vsel %vm294, %v291, %v293
      %v296 = vsel %vm294, %v293, %v291
      %s297 = scalar_lea.vmem %s1, 5
      %v298 = vld [vmem:[%s297] ss:$8 sm:$0x3]
      %v300 = vlaneseq
      %v301 = vshrl.u32 %v300, 7
      %v302 = vsub.s32 0, %v301
      %v303 = vrot.slane %v298, %v302
      %v304 = vlaneseq
      %v305 = vshrl.u32 %v304, 7
      %v306 = vsub.s32 1, %v305
      %v307 = vrot.slane %v298, %v306
      %v310 = vmul.f32 %v295, %v303
      %v311 = vmul.f32 %v296, %v307
      %312 = vrot.lane.b32.xlu0 %v199, 113
      %v313 = vpop.permute.xlu0 %312
      %314 = vrot.lane.b32.xlu0 %v200, 113
      %v315 = vpop.permute.xlu0 %314
      %vm316 = vcmp.lt.s32.totalorder %v206, 113
      %v317 = vsel %vm316, %v313, %v315
      %v318 = vsel %vm316, %v315, %v313
      %s319 = scalar_lea.vmem %s1, 6
      %v320 = vld [vmem:[%s319] ss:$8 sm:$0x3]
      %v322 = vlaneseq
      %v323 = vshrl.u32 %v322, 7
      %v324 = vsub.s32 0, %v323
      %v325 = vrot.slane %v320, %v324
      %v326 = vlaneseq
      %v327 = vshrl.u32 %v326, 7
      %v328 = vsub.s32 1, %v327
      %v329 = vrot.slane %v320, %v328
      %v332 = vmul.f32 %v317, %v325
      %v333 = vmul.f32 %v318, %v329
      %334 = vrot.lane.b32.xlu0 %v199, 112
      %v335 = vpop.permute.xlu0 %334
      %336 = vrot.lane.b32.xlu0 %v200, 112
      %v337 = vpop.permute.xlu0 %336
      %vm338 = vcmp.lt.s32.totalorder %v206, 112
      %v339 = vsel %vm338, %v335, %v337
      %v340 = vsel %vm338, %v337, %v335
      %s341 = scalar_lea.vmem %s1, 7
      %v342 = vld [vmem:[%s341] ss:$8 sm:$0x3]
      %v344 = vlaneseq
      %v345 = vshrl.u32 %v344, 7
      %v346 = vsub.s32 0, %v345
      %v347 = vrot.slane %v342, %v346
      %v348 = vlaneseq
      %v349 = vshrl.u32 %v348, 7
      %v350 = vsub.s32 1, %v349
      %v351 = vrot.slane %v342, %v350
      %v354 = vmul.f32 %v339, %v347
      %v355 = vmul.f32 %v340, %v351
      %356 = vrot.lane.b32.xlu0 %v199, 111
      %v357 = vpop.permute.xlu0 %356
      %358 = vrot.lane.b32.xlu0 %v200, 111
      %v359 = vpop.permute.xlu0 %358
      %vm360 = vcmp.lt.s32.totalorder %v206, 111
      %v361 = vsel %vm360, %v357, %v359
      %v362 = vsel %vm360, %v359, %v357
      %s363 = scalar_lea.vmem %s1, 16
      %v364 = vld [vmem:[%s363] ss:$8 sm:$0x3]
      %v366 = vlaneseq
      %v367 = vshrl.u32 %v366, 7
      %v368 = vsub.s32 0, %v367
      %v369 = vrot.slane %v364, %v368
      %v370 = vlaneseq
      %v371 = vshrl.u32 %v370, 7
      %v372 = vsub.s32 1, %v371
      %v373 = vrot.slane %v364, %v372
      %v376 = vmul.f32 %v361, %v369
      %v377 = vmul.f32 %v362, %v373
      %v378 = vpack.c.bf16 %v244, %v222
      %v379 = vpack.c.bf16 %v245, %v223
      %v380 = vpack.c.bf16 %v288, %v266
      %v381 = vpack.c.bf16 %v289, %v267
      %v382 = vpack.c.bf16 %v310, %v199
      %v383 = vpack.c.bf16 %v311, %v200
      %v384 = vpack.c.bf16 %v354, %v332
      %v385 = vpack.c.bf16 %v355, %v333
      %v386 = vpack.c.bf16 %v376, %v376
      %v387 = vpack.c.bf16 %v377, %v377
      %v388 = vld [vmem:[%s2] sm:$0xf]
      %v389 = vld [vmem:[%s2 + $0x4] sm:$0xf]
      %v390 = vld [vmem:[%s2 + $0x8] sm:$0xf]
      %v391 = vld [vmem:[%s2 + $0xc] sm:$0xf]
      %v392 = vld [vmem:[%s2 + $0x10] sm:$0xf]
      %v393 = vld [vmem:[%s2 + $0x14] sm:$0xf]
      %v394 = vld [vmem:[%s2 + $0x18] sm:$0xf]
      %v395 = vld [vmem:[%s2 + $0x1c] sm:$0xf]
      %v396 = vld [vmem:[%s2 + $0x20] sm:$0xf]
      %v406 = vunpack.c.l.b16 %v388
      %v407 = vunpack.c.l.b16 %v389
      %v408 = vunpack.c.l.b16 %v390
      %v409 = vunpack.c.l.b16 %v391
      %v410 = vunpack.c.l.b16 %v392
      %v411 = vunpack.c.l.b16 %v393
      %v412 = vunpack.c.l.b16 %v394
      %v413 = vunpack.c.l.b16 %v395
      %v414 = vunpack.c.l.b16 %v396
      %v415 = vpack.c.b16 %v407, %v406
      %v416 = vpack.c.b16 %v409, %v408
      %v417 = vpack.c.b16 %v411, %v410
      %v418 = vpack.c.b16 %v413, %v412
      %v419 = vpack.c.b16 %v414, %v414
      %vm420 = vcmask 588800
      %v422 = vsel %vm420, %v415, 0
      %v425 = vsel %vm420, %v416, 0
      %v428 = vsel %vm420, %v417, 0
      %v431 = vsel %vm420, %v418, 0
      %v434 = vsel %vm420, %v419, 0
      %vm436 = vcmask 1043456
      %v438 = vsel %vm436, %v386, 0
      %v441 = vsel %vm436, %v387, 0
      %443 = vmatprep.subr.bf16.mxu0 %v379
      %444 = vmatpush1.bf16.msra.mxu0 %v378
      %445 = vmatprep.subr.bf16.mxu0 %v381
      %446 = vmatpush1.bf16.msra.mxu0 %v380
      %447 = vmatprep.subr.bf16.mxu0 %v383
      %448 = vmatpush1.bf16.msra.mxu0 %v382
      %449 = vmatprep.subr.bf16.mxu0 %v385
      %450 = vmatpush1.bf16.msra.mxu0 %v384
      %451 = vmatprep.subr.bf16.mxu0 %v441
      %452 = vmatpush1.bf16.msra.mxu0 %v438
      %453 = vmatprep.subr.bf16.mxu0 0
      %454 = vmatpush1.bf16.msra.mxu0 0
      %455 = vmatprep.subr.bf16.mxu0 0
      %456 = vmatpush1.bf16.msra.mxu0 0
      %457 = vmatprep.subr.bf16.mxu0 0
      %458 = vmatpush1.bf16.msra.mxu0 0
      %459 = vmatprep.subr.bf16.mxu0 0
      %460 = vmatpush1.bf16.msra.mxu0 0
      %461 = vmatprep.subr.bf16.mxu0 0
      %462 = vmatpush1.bf16.msra.mxu0 0
      %463 = vmatprep.subr.bf16.mxu0 0
      %464 = vmatpush1.bf16.msra.mxu0 0
      %465 = vmatprep.subr.bf16.mxu0 0
      %466 = vmatpush1.bf16.msra.mxu0 0
      %467 = vmatprep.subr.bf16.mxu0 0
      %468 = vmatpush1.bf16.msra.mxu0 0
      %469 = vmatprep.subr.bf16.mxu0 0
      %470 = vmatpush1.bf16.msra.mxu0 0
      %471 = vmatprep.subr.bf16.mxu0 0
      %472 = vmatpush1.bf16.msra.mxu0 0
      %473 = vmatprep.subr.bf16.mxu0 0
      %474 = vmatpush1.bf16.msra.mxu0 0
      %475 = vmatprep.mubr.bf16.mxu0 0
      %476 = vmatmul.mubr.bf16.gmra.mrb[0].mxu0 %v422
      %v477 = vpop.f32.mrb[0].mxu0
      %v478 = vadd.f32 0.0, %v477
      %v479 = vpop.f32.mrb[0].mxu0
      %v480 = vadd.f32 0.0, %v479
      %v481 = vpop.f32.mrb[0].mxu0
      %v482 = vadd.f32 0.0, %v481
      %v483 = vpop.f32.mrb[0].mxu0
      %v484 = vadd.f32 0.0, %v483
      %485 = vmatprep.mubr.bf16.mxu0 0
      %486 = vmatmul.mubr.bf16.gmra.mrb[0].mxu0 %v425
      %v487 = vpop.f32.mrb[0].mxu0
      %v488 = vadd.f32 0.0, %v487
      %v489 = vpop.f32.mrb[0].mxu0
      %v490 = vadd.f32 0.0, %v489
      %v491 = vpop.f32.mrb[0].mxu0
      %v492 = vadd.f32 0.0, %v491
      %v493 = vpop.f32.mrb[0].mxu0
      %v494 = vadd.f32 0.0, %v493
      %495 = vmatprep.mubr.bf16.mxu0 0
      %496 = vmatmul.mubr.bf16.gmra.mrb[0].mxu0 %v428
      %v497 = vpop.f32.mrb[0].mxu0
      %v498 = vadd.f32 0.0, %v497
      %v499 = vpop.f32.mrb[0].mxu0
      %v500 = vadd.f32 0.0, %v499
      %v501 = vpop.f32.mrb[0].mxu0
      %v502 = vadd.f32 0.0, %v501
      %v503 = vpop.f32.mrb[0].mxu0
      %v504 = vadd.f32 0.0, %v503
      %505 = vmatprep.mubr.bf16.mxu0 0
      %506 = vmatmul.mubr.bf16.gmra.mrb[0].mxu0 %v431
      %v507 = vpop.f32.mrb[0].mxu0
      %v508 = vadd.f32 0.0, %v507
      %v509 = vpop.f32.mrb[0].mxu0
      %v510 = vadd.f32 0.0, %v509
      %v511 = vpop.f32.mrb[0].mxu0
      %v512 = vadd.f32 0.0, %v511
      %v513 = vpop.f32.mrb[0].mxu0
      %v514 = vadd.f32 0.0, %v513
      %515 = vmatprep.mubr.bf16.mxu0 0
      %516 = vmatmul.mubr.bf16.gmra.mrb[0].mxu0 %v434
      %v517 = vpop.f32.mrb[0].mxu0
      %v518 = vadd.f32 0.0, %v517
      %v519 = vpop.f32.mrb[0].mxu0
      %v520 = vadd.f32 0.0, %v519
      %v521 = vpop.f32.mrb[0].mxu0
      %v522 = vpop.f32.mrb[0].mxu0
      %523 = vdwg.mxu0
      %v524 = vmul.f32 %v478, 0.2
      %v525 = vmul.f32 %v480, 0.2
      %v526 = vmul.f32 %v482, 0.2
      %v527 = vmul.f32 %v484, 0.2
      %v528 = vmul.f32 %v488, 0.2
      %v529 = vmul.f32 %v490, 0.2
      %v530 = vmax.f32 %v478, %v524
      %v531 = vmax.f32 %v480, %v525
      %v532 = vmax.f32 %v482, %v526
      %v533 = vmax.f32 %v484, %v527
      %v534 = vmax.f32 %v488, %v528
      %v535 = vmax.f32 %v490, %v529
      %v536 = vmul.f32 %v492, 0.2
      %v537 = vmul.f32 %v494, 0.2
      %v538 = vmul.f32 %v498, 0.2
      %v539 = vmul.f32 %v500, 0.2
      %v540 = vmul.f32 %v502, 0.2
      %v541 = vmul.f32 %v504, 0.2
      %v542 = vmax.f32 %v492, %v536
      %v543 = vmax.f32 %v494, %v537
      %v544 = vmax.f32 %v498, %v538
      %v545 = vmax.f32 %v500, %v539
      %v546 = vmax.f32 %v502, %v540
      %v547 = vmax.f32 %v504, %v541
      %548 = vrot.lane.b32.xlu0 %v542, 17
      %v549 = vpop.permute.xlu0 %548
      %550 = vrot.lane.b32.xlu0 %v544, 17
      %v551 = vpop.permute.xlu0 %550
      %552 = vrot.lane.b32.xlu0 %v546, 17
      %v553 = vpop.permute.xlu0 %552
      %554 = vrot.lane.b32.xlu0 %v543, 17
      %v555 = vpop.permute.xlu0 %554
      %556 = vrot.lane.b32.xlu0 %v545, 17
      %v557 = vpop.permute.xlu0 %556
      %558 = vrot.lane.b32.xlu0 %v547, 17
      %v559 = vpop.permute.xlu0 %558
      %v560 = vsel %vm207, %v549, %v555
      %v561 = vsel %vm207, %v551, %v557
      %v562 = vsel %vm207, %v553, %v559
      %v563 = vsel %vm207, %v555, %v549
      %v564 = vsel %vm207, %v557, %v551
      %v565 = vsel %vm207, %v559, %v553
      %v566 = vmul.f32 %v563, %v215
      %v567 = vmul.f32 %v560, %v219
      %v568 = vmul.f32 %v564, %v215
      %v569 = vmul.f32 %v561, %v219
      %v570 = vmul.f32 %v565, %v215
      %v571 = vmul.f32 %v562, %v219
      %v572 = vld [vmem:[%s3] sm:$0xf]
      %v573 = vld [vmem:[%s3 + $0x4] sm:$0xf]
      %v574 = vld [vmem:[%s3 + $0x8] sm:$0xf]
      %v575 = vpack.c.bf16 %v568, %v566
      %v576 = vpack.c.bf16 %v569, %v567
      %v577 = vpack.c.bf16 %v570, %v570
      %v578 = vpack.c.bf16 %v571, %v571
      %v582 = vunpack.c.l.b16 %v572
      %v583 = vunpack.c.l.b16 %v573
      %v584 = vunpack.c.l.b16 %v574
      %v585 = vpack.c.b16 %v583, %v582
      %v586 = vpack.c.b16 %v584, %v584
      %vm587 = vcmask 195584
      %v589 = vsel %vm587, %v585, 0
      %v592 = vsel %vm587, %v586, 0
      %v595 = vsel %vm436, %v577, 0
      %v598 = vsel %vm436, %v578, 0
      %600 = vmatprep.subr.bf16.mxu0 %v576
      %601 = vmatpush1.bf16.msra.mxu0 %v575
      %602 = vmatprep.subr.bf16.mxu0 %v598
      %603 = vmatpush1.bf16.msra.mxu0 %v595
      %604 = vmatprep.subr.bf16.mxu0 0
      %605 = vmatpush1.bf16.msra.mxu0 0
      %606 = vmatprep.subr.bf16.mxu0 0
      %607 = vmatpush1.bf16.msra.mxu0 0
      %608 = vmatprep.subr.bf16.mxu0 0
      %609 = vmatpush1.bf16.msra.mxu0 0
      %610 = vmatprep.subr.bf16.mxu0 0
      %611 = vmatpush1.bf16.msra.mxu0 0
      %612 = vmatprep.subr.bf16.mxu0 0
      %613 = vmatpush1.bf16.msra.mxu0 0
      %614 = vmatprep.subr.bf16.mxu0 0
      %615 = vmatpush1.bf16.msra.mxu0 0
      %616 = vmatprep.subr.bf16.mxu0 0
      %617 = vmatpush1.bf16.msra.mxu0 0
      %618 = vmatprep.subr.bf16.mxu0 0
      %619 = vmatpush1.bf16.msra.mxu0 0
      %620 = vmatprep.subr.bf16.mxu0 0
      %621 = vmatpush1.bf16.msra.mxu0 0
      %622 = vmatprep.subr.bf16.mxu0 0
      %623 = vmatpush1.bf16.msra.mxu0 0
      %624 = vmatprep.subr.bf16.mxu0 0
      %625 = vmatpush1.bf16.msra.mxu0 0
      %626 = vmatprep.subr.bf16.mxu0 0
      %627 = vmatpush1.bf16.msra.mxu0 0
      %628 = vmatprep.subr.bf16.mxu0 0
      %629 = vmatpush1.bf16.msra.mxu0 0
      %630 = vmatprep.subr.bf16.mxu0 0
      %631 = vmatpush1.bf16.msra.mxu0 0
      %632 = vmatprep.mubr.bf16.mxu0 0
      %633 = vmatmul.mubr.bf16.gmra.mrb[0].mxu0 %v589
      %v634 = vpop.f32.mrb[0].mxu0
      %v635 = vadd.f32 0.0, %v634
      %v636 = vpop.f32.mrb[0].mxu0
      %v637 = vadd.f32 0.0, %v636
      %v638 = vpop.f32.mrb[0].mxu0
      %v639 = vadd.f32 0.0, %v638
      %v640 = vpop.f32.mrb[0].mxu0
      %v641 = vadd.f32 0.0, %v640
      %642 = vmatprep.mubr.bf16.mxu0 0
      %643 = vmatmul.mubr.bf16.gmra.mrb[0].mxu0 %v592
      %v644 = vpop.f32.mrb[0].mxu0
      %v645 = vadd.f32 0.0, %v644
      %v646 = vpop.f32.mrb[0].mxu0
      %v647 = vadd.f32 0.0, %v646
      %v648 = vpop.f32.mrb[0].mxu0
      %v649 = vpop.f32.mrb[0].mxu0
      %650 = vdwg.mxu0
      %v651 = vadd.f32 %v508, %v635
      %v652 = vadd.f32 %v510, %v637
      %v653 = vadd.f32 %v512, %v639
      %v654 = vadd.f32 %v514, %v641
      %v655 = vadd.f32 %v518, %v645
      %v656 = vadd.f32 %v520, %v647
      %657 = vrot.lane.b32.xlu0 %v542, 16
      %v658 = vpop.permute.xlu0 %657
      %659 = vrot.lane.b32.xlu0 %v544, 16
      %v660 = vpop.permute.xlu0 %659
      %661 = vrot.lane.b32.xlu0 %v546, 16
      %v662 = vpop.permute.xlu0 %661
      %663 = vrot.lane.b32.xlu0 %v543, 16
      %v664 = vpop.permute.xlu0 %663
      %665 = vrot.lane.b32.xlu0 %v545, 16
      %v666 = vpop.permute.xlu0 %665
      %667 = vrot.lane.b32.xlu0 %v547, 16
      %v668 = vpop.permute.xlu0 %667
      %v669 = vsel %vm228, %v658, %v664
      %v670 = vsel %vm228, %v660, %v666
      %v671 = vsel %vm228, %v662, %v668
      %v672 = vsel %vm228, %v664, %v658
      %v673 = vsel %vm228, %v666, %v660
      %v674 = vsel %vm228, %v668, %v662
      %v675 = vmul.f32 %v672, %v237
      %v676 = vmul.f32 %v669, %v241
      %v677 = vmul.f32 %v673, %v237
      %v678 = vmul.f32 %v670, %v241
      %v679 = vmul.f32 %v674, %v237
      %v680 = vmul.f32 %v671, %v241
      %s681 = scalar_lea.vmem %s3, 12
      %v682 = vld [vmem:[%s681] sm:$0xf]
      %v683 = vld [vmem:[%s681 + $0x4] sm:$0xf]
      %v684 = vld [vmem:[%s681 + $0x8] sm:$0xf]
      %v685 = vpack.c.bf16 %v677, %v675
      %v686 = vpack.c.bf16 %v678, %v676
      %v687 = vpack.c.bf16 %v679, %v679
      %v688 = vpack.c.bf16 %v680, %v680
      %v692 = vunpack.c.l.b16 %v682
      %v693 = vunpack.c.l.b16 %v683
      %v694 = vunpack.c.l.b16 %v684
      %v695 = vpack.c.b16 %v693, %v692
      %v696 = vpack.c.b16 %v694, %v694
      %v698 = vsel %vm587, %v695, 0
      %v701 = vsel %vm587, %v696, 0
      %v704 = vsel %vm436, %v687, 0
      %v707 = vsel %vm436, %v688, 0
      %709 = vmatprep.subr.bf16.mxu0 %v686
      %710 = vmatpush1.bf16.msra.mxu0 %v685
      %711 = vmatprep.subr.bf16.mxu0 %v707
      %712 = vmatpush1.bf16.msra.mxu0 %v704
      %713 = vmatprep.subr.bf16.mxu0 0
      %714 = vmatpush1.bf16.msra.mxu0 0
      %715 = vmatprep.subr.bf16.mxu0 0
      %716 = vmatpush1.bf16.msra.mxu0 0
      %717 = vmatprep.subr.bf16.mxu0 0
      %718 = vmatpush1.bf16.msra.mxu0 0
      %719 = vmatprep.subr.bf16.mxu0 0
      %720 = vmatpush1.bf16.msra.mxu0 0
      %721 = vmatprep.subr.bf16.mxu0 0
      %722 = vmatpush1.bf16.msra.mxu0 0
      %723 = vmatprep.subr.bf16.mxu0 0
      %724 = vmatpush1.bf16.msra.mxu0 0
      %725 = vmatprep.subr.bf16.mxu0 0
      %726 = vmatpush1.bf16.msra.mxu0 0
      %727 = vmatprep.subr.bf16.mxu0 0
      %728 = vmatpush1.bf16.msra.mxu0 0
      %729 = vmatprep.subr.bf16.mxu0 0
      %730 = vmatpush1.bf16.msra.mxu0 0
      %731 = vmatprep.subr.bf16.mxu0 0
      %732 = vmatpush1.bf16.msra.mxu0 0
      %733 = vmatprep.subr.bf16.mxu0 0
      %734 = vmatpush1.bf16.msra.mxu0 0
      %735 = vmatprep.subr.bf16.mxu0 0
      %736 = vmatpush1.bf16.msra.mxu0 0
      %737 = vmatprep.subr.bf16.mxu0 0
      %738 = vmatpush1.bf16.msra.mxu0 0
      %739 = vmatprep.subr.bf16.mxu0 0
      %740 = vmatpush1.bf16.msra.mxu0 0
      %741 = vmatprep.mubr.bf16.mxu0 0
      %742 = vmatmul.mubr.bf16.gmra.mrb[0].mxu0 %v698
      %v743 = vpop.f32.mrb[0].mxu0
      %v744 = vadd.f32 0.0, %v743
      %v745 = vpop.f32.mrb[0].mxu0
      %v746 = vadd.f32 0.0, %v745
      %v747 = vpop.f32.mrb[0].mxu0
      %v748 = vadd.f32 0.0, %v747
      %v749 = vpop.f32.mrb[0].mxu0
      %v750 = vadd.f32 0.0, %v749
      %751 = vmatprep.mubr.bf16.mxu0 0
      %752 = vmatmul.mubr.bf16.gmra.mrb[0].mxu0 %v701
      %v753 = vpop.f32.mrb[0].mxu0
      %v754 = vadd.f32 0.0, %v753
      %v755 = vpop.f32.mrb[0].mxu0
      %v756 = vadd.f32 0.0, %v755
      %v757 = vpop.f32.mrb[0].mxu0
      %v758 = vpop.f32.mrb[0].mxu0
      %759 = vdwg.mxu0
      %v760 = vadd.f32 %v651, %v744
      %v761 = vadd.f32 %v652, %v746
      %v762 = vadd.f32 %v653, %v748
      %v763 = vadd.f32 %v654, %v750
      %v764 = vadd.f32 %v655, %v754
      %v765 = vadd.f32 %v656, %v756
      %766 = vrot.lane.b32.xlu0 %v542, 15
      %v767 = vpop.permute.xlu0 %766
      %768 = vrot.lane.b32.xlu0 %v544, 15
      %v769 = vpop.permute.xlu0 %768
      %770 = vrot.lane.b32.xlu0 %v546, 15
      %v771 = vpop.permute.xlu0 %770
      %772 = vrot.lane.b32.xlu0 %v543, 15
      %v773 = vpop.permute.xlu0 %772
      %774 = vrot.lane.b32.xlu0 %v545, 15
      %v775 = vpop.permute.xlu0 %774
      %776 = vrot.lane.b32.xlu0 %v547, 15
      %v777 = vpop.permute.xlu0 %776
      %v778 = vsel %vm250, %v767, %v773
      %v779 = vsel %vm250, %v769, %v775
      %v780 = vsel %vm250, %v771, %v777
      %v781 = vsel %vm250, %v773, %v767
      %v782 = vsel %vm250, %v775, %v769
      %v783 = vsel %vm250, %v777, %v771
      %v784 = vmul.f32 %v781, %v259
      %v785 = vmul.f32 %v778, %v263
      %v786 = vmul.f32 %v782, %v259
      %v787 = vmul.f32 %v779, %v263
      %v788 = vmul.f32 %v783, %v259
      %v789 = vmul.f32 %v780, %v263
      %s790 = scalar_lea.vmem %s3, 24
      %v791 = vld [vmem:[%s790] sm:$0xf]
      %v792 = vld [vmem:[%s790 + $0x4] sm:$0xf]
      %v793 = vld [vmem:[%s790 + $0x8] sm:$0xf]
      %v794 = vpack.c.bf16 %v786, %v784
      %v795 = vpack.c.bf16 %v787, %v785
      %v796 = vpack.c.bf16 %v788, %v788
      %v797 = vpack.c.bf16 %v789, %v789
      %v801 = vunpack.c.l.b16 %v791
      %v802 = vunpack.c.l.b16 %v792
      %v803 = vunpack.c.l.b16 %v793
      %v804 = vpack.c.b16 %v802, %v801
      %v805 = vpack.c.b16 %v803, %v803
      %v807 = vsel %vm587, %v804, 0
      %v810 = vsel %vm587, %v805, 0
      %v813 = vsel %vm436, %v796, 0
      %v816 = vsel %vm436, %v797, 0
      %818 = vmatprep.subr.bf16.mxu0 %v795
      %819 = vmatpush1.bf16.msra.mxu0 %v794
      %820 = vmatprep.subr.bf16.mxu0 %v816
      %821 = vmatpush1.bf16.msra.mxu0 %v813
      %822 = vmatprep.subr.bf16.mxu0 0
      %823 = vmatpush1.bf16.msra.mxu0 0
      %824 = vmatprep.subr.bf16.mxu0 0
      %825 = vmatpush1.bf16.msra.mxu0 0
      %826 = vmatprep.subr.bf16.mxu0 0
      %827 = vmatpush1.bf16.msra.mxu0 0
      %828 = vmatprep.subr.bf16.mxu0 0
      %829 = vmatpush1.bf16.msra.mxu0 0
      %830 = vmatprep.subr.bf16.mxu0 0
      %831 = vmatpush1.bf16.msra.mxu0 0
      %832 = vmatprep.subr.bf16.mxu0 0
      %833 = vmatpush1.bf16.msra.mxu0 0
      %834 = vmatprep.subr.bf16.mxu0 0
      %835 = vmatpush1.bf16.msra.mxu0 0
      %836 = vmatprep.subr.bf16.mxu0 0
      %837 = vmatpush1.bf16.msra.mxu0 0
      %838 = vmatprep.subr.bf16.mxu0 0
      %839 = vmatpush1.bf16.msra.mxu0 0
      %840 = vmatprep.subr.bf16.mxu0 0
      %841 = vmatpush1.bf16.msra.mxu0 0
      %842 = vmatprep.subr.bf16.mxu0 0
      %843 = vmatpush1.bf16.msra.mxu0 0
      %844 = vmatprep.subr.bf16.mxu0 0
      %845 = vmatpush1.bf16.msra.mxu0 0
      %846 = vmatprep.subr.bf16.mxu0 0
      %847 = vmatpush1.bf16.msra.mxu0 0
      %848 = vmatprep.subr.bf16.mxu0 0
      %849 = vmatpush1.bf16.msra.mxu0 0
      %850 = vmatprep.mubr.bf16.mxu0 0
      %851 = vmatmul.mubr.bf16.gmra.mrb[0].mxu0 %v807
      %v852 = vpop.f32.mrb[0].mxu0
      %v853 = vadd.f32 0.0, %v852
      %v854 = vpop.f32.mrb[0].mxu0
      %v855 = vadd.f32 0.0, %v854
      %v856 = vpop.f32.mrb[0].mxu0
      %v857 = vadd.f32 0.0, %v856
      %v858 = vpop.f32.mrb[0].mxu0
      %v859 = vadd.f32 0.0, %v858
      %860 = vmatprep.mubr.bf16.mxu0 0
      %861 = vmatmul.mubr.bf16.gmra.mrb[0].mxu0 %v810
      %v862 = vpop.f32.mrb[0].mxu0
      %v863 = vadd.f32 0.0, %v862
      %v864 = vpop.f32.mrb[0].mxu0
      %v865 = vadd.f32 0.0, %v864
      %v866 = vpop.f32.mrb[0].mxu0
      %v867 = vpop.f32.mrb[0].mxu0
      %868 = vdwg.mxu0
      %v869 = vadd.f32 %v760, %v853
      %v870 = vadd.f32 %v761, %v855
      %v871 = vadd.f32 %v762, %v857
      %v872 = vadd.f32 %v763, %v859
      %v873 = vadd.f32 %v764, %v863
      %v874 = vadd.f32 %v765, %v865
      %875 = vrot.lane.b32.xlu0 %v542, 1
      %v876 = vpop.permute.xlu0 %875
      %877 = vrot.lane.b32.xlu0 %v544, 1
      %v878 = vpop.permute.xlu0 %877
      %879 = vrot.lane.b32.xlu0 %v546, 1
      %v880 = vpop.permute.xlu0 %879
      %881 = vrot.lane.b32.xlu0 %v543, 1
      %v882 = vpop.permute.xlu0 %881
      %883 = vrot.lane.b32.xlu0 %v545, 1
      %v884 = vpop.permute.xlu0 %883
      %885 = vrot.lane.b32.xlu0 %v547, 1
      %v886 = vpop.permute.xlu0 %885
      %v887 = vsel %vm272, %v876, %v882
      %v888 = vsel %vm272, %v878, %v884
      %v889 = vsel %vm272, %v880, %v886
      %v890 = vsel %vm272, %v882, %v876
      %v891 = vsel %vm272, %v884, %v878
      %v892 = vsel %vm272, %v886, %v880
      %v893 = vmul.f32 %v890, %v281
      %v894 = vmul.f32 %v887, %v285
      %v895 = vmul.f32 %v891, %v281
      %v896 = vmul.f32 %v888, %v285
      %v897 = vmul.f32 %v892, %v281
      %v898 = vmul.f32 %v889, %v285
      %s899 = scalar_lea.vmem %s3, 36
      %v900 = vld [vmem:[%s899] sm:$0xf]
      %v901 = vld [vmem:[%s899 + $0x4] sm:$0xf]
      %v902 = vld [vmem:[%s899 + $0x8] sm:$0xf]
      %v903 = vpack.c.bf16 %v895, %v893
      %v904 = vpack.c.bf16 %v896, %v894
      %v905 = vpack.c.bf16 %v897, %v897
      %v906 = vpack.c.bf16 %v898, %v898
      %v910 = vunpack.c.l.b16 %v900
      %v911 = vunpack.c.l.b16 %v901
      %v912 = vunpack.c.l.b16 %v902
      %v913 = vpack.c.b16 %v911, %v910
      %v914 = vpack.c.b16 %v912, %v912
      %v916 = vsel %vm587, %v913, 0
      %v919 = vsel %vm587, %v914, 0
      %v922 = vsel %vm436, %v905, 0
      %v925 = vsel %vm436, %v906, 0
      %927 = vmatprep.subr.bf16.mxu0 %v904
      %928 = vmatpush1.bf16.msra.mxu0 %v903
      %929 = vmatprep.subr.bf16.mxu0 %v925
      %930 = vmatpush1.bf16.msra.mxu0 %v922
      %931 = vmatprep.subr.bf16.mxu0 0
      %932 = vmatpush1.bf16.msra.mxu0 0
      %933 = vmatprep.subr.bf16.mxu0 0
      %934 = vmatpush1.bf16.msra.mxu0 0
      %935 = vmatprep.subr.bf16.mxu0 0
      %936 = vmatpush1.bf16.msra.mxu0 0
      %937 = vmatprep.subr.bf16.mxu0 0
      %938 = vmatpush1.bf16.msra.mxu0 0
      %939 = vmatprep.subr.bf16.mxu0 0
      %940 = vmatpush1.bf16.msra.mxu0 0
      %941 = vmatprep.subr.bf16.mxu0 0
      %942 = vmatpush1.bf16.msra.mxu0 0
      %943 = vmatprep.subr.bf16.mxu0 0
      %944 = vmatpush1.bf16.msra.mxu0 0
      %945 = vmatprep.subr.bf16.mxu0 0
      %946 = vmatpush1.bf16.msra.mxu0 0
      %947 = vmatprep.subr.bf16.mxu0 0
      %948 = vmatpush1.bf16.msra.mxu0 0
      %949 = vmatprep.subr.bf16.mxu0 0
      %950 = vmatpush1.bf16.msra.mxu0 0
      %951 = vmatprep.subr.bf16.mxu0 0
      %952 = vmatpush1.bf16.msra.mxu0 0
      %953 = vmatprep.subr.bf16.mxu0 0
      %954 = vmatpush1.bf16.msra.mxu0 0
      %955 = vmatprep.subr.bf16.mxu0 0
      %956 = vmatpush1.bf16.msra.mxu0 0
      %957 = vmatprep.subr.bf16.mxu0 0
      %958 = vmatpush1.bf16.msra.mxu0 0
      %959 = vmatprep.mubr.bf16.mxu0 0
      %960 = vmatmul.mubr.bf16.gmra.mrb[0].mxu0 %v916
      %v961 = vpop.f32.mrb[0].mxu0
      %v962 = vadd.f32 0.0, %v961
      %v963 = vpop.f32.mrb[0].mxu0
      %v964 = vadd.f32 0.0, %v963
      %v965 = vpop.f32.mrb[0].mxu0
      %v966 = vadd.f32 0.0, %v965
      %v967 = vpop.f32.mrb[0].mxu0
      %v968 = vadd.f32 0.0, %v967
      %969 = vmatprep.mubr.bf16.mxu0 0
      %970 = vmatmul.mubr.bf16.gmra.mrb[0].mxu0 %v919
      %v971 = vpop.f32.mrb[0].mxu0
      %v972 = vadd.f32 0.0, %v971
      %v973 = vpop.f32.mrb[0].mxu0
      %v974 = vadd.f32 0.0, %v973
      %v975 = vpop.f32.mrb[0].mxu0
      %v976 = vpop.f32.mrb[0].mxu0
      %977 = vdwg.mxu0
      %v978 = vadd.f32 %v869, %v962
      %v979 = vadd.f32 %v870, %v964
      %v980 = vadd.f32 %v871, %v966
      %v981 = vadd.f32 %v872, %v968
      %v982 = vadd.f32 %v873, %v972
      %v983 = vadd.f32 %v874, %v974
      %s984 = scalar_lea.vmem %s3, 48
      %v985 = vld [vmem:[%s984] sm:$0xf]
      %v986 = vld [vmem:[%s984 + $0x4] sm:$0xf]
      %v987 = vld [vmem:[%s984 + $0x8] sm:$0xf]
      %v988 = vpack.c.bf16 %v544, %v542
      %v989 = vpack.c.bf16 %v545, %v543
      %v990 = vpack.c.bf16 %v546, %v546
      %v991 = vpack.c.bf16 %v547, %v547
      %v995 = vunpack.c.l.b16 %v985
      %v996 = vunpack.c.l.b16 %v986
      %v997 = vunpack.c.l.b16 %v987
      %v998 = vpack.c.b16 %v996, %v995
      %v999 = vpack.c.b16 %v997, %v997
      %v1001 = vsel %vm587, %v998, 0
      %v1004 = vsel %vm587, %v999, 0
      %v1007 = vsel %vm436, %v990, 0
      %v1010 = vsel %vm436, %v991, 0
      %1012 = vmatprep.subr.bf16.mxu0 %v989
      %1013 = vmatpush1.bf16.msra.mxu0 %v988
      %1014 = vmatprep.subr.bf16.mxu0 %v1010
      %1015 = vmatpush1.bf16.msra.mxu0 %v1007
      %1016 = vmatprep.subr.bf16.mxu0 0
      %1017 = vmatpush1.bf16.msra.mxu0 0
      %1018 = vmatprep.subr.bf16.mxu0 0
      %1019 = vmatpush1.bf16.msra.mxu0 0
      %1020 = vmatprep.subr.bf16.mxu0 0
      %1021 = vmatpush1.bf16.msra.mxu0 0
      %1022 = vmatprep.subr.bf16.mxu0 0
      %1023 = vmatpush1.bf16.msra.mxu0 0
      %1024 = vmatprep.subr.bf16.mxu0 0
      %1025 = vmatpush1.bf16.msra.mxu0 0
      %1026 = vmatprep.subr.bf16.mxu0 0
      %1027 = vmatpush1.bf16.msra.mxu0 0
      %1028 = vmatprep.subr.bf16.mxu0 0
      %1029 = vmatpush1.bf16.msra.mxu0 0
      %1030 = vmatprep.subr.bf16.mxu0 0
      %1031 = vmatpush1.bf16.msra.mxu0 0
      %1032 = vmatprep.subr.bf16.mxu0 0
      %1033 = vmatpush1.bf16.msra.mxu0 0
      %1034 = vmatprep.subr.bf16.mxu0 0
      %1035 = vmatpush1.bf16.msra.mxu0 0
      %1036 = vmatprep.subr.bf16.mxu0 0
      %1037 = vmatpush1.bf16.msra.mxu0 0
      %1038 = vmatprep.subr.bf16.mxu0 0
      %1039 = vmatpush1.bf16.msra.mxu0 0
      %1040 = vmatprep.subr.bf16.mxu0 0
      %1041 = vmatpush1.bf16.msra.mxu0 0
      %1042 = vmatprep.subr.bf16.mxu0 0
      %1043 = vmatpush1.bf16.msra.mxu0 0
      %1044 = vmatprep.mubr.bf16.mxu0 0
      %1045 = vmatmul.mubr.bf16.gmra.mrb[0].mxu0 %v1001
      %v1046 = vpop.f32.mrb[0].mxu0
      %v1047 = vadd.f32 0.0, %v1046
      %v1048 = vpop.f32.mrb[0].mxu0
      %v1049 = vadd.f32 0.0, %v1048
      %v1050 = vpop.f32.mrb[0].mxu0
      %v1051 = vadd.f32 0.0, %v1050
      %v1052 = vpop.f32.mrb[0].mxu0
      %v1053 = vadd.f32 0.0, %v1052
      %1054 = vmatprep.mubr.bf16.mxu0 0
      %1055 = vmatmul.mubr.bf16.gmra.mrb[0].mxu0 %v1004
      %v1056 = vpop.f32.mrb[0].mxu0
      %v1057 = vadd.f32 0.0, %v1056
      %v1058 = vpop.f32.mrb[0].mxu0
      %v1059 = vadd.f32 0.0, %v1058
      %v1060 = vpop.f32.mrb[0].mxu0
      %v1061 = vpop.f32.mrb[0].mxu0
      %1062 = vdwg.mxu0
      %v1063 = vadd.f32 %v978, %v1047
      %v1064 = vadd.f32 %v979, %v1049
      %v1065 = vadd.f32 %v980, %v1051
      %v1066 = vadd.f32 %v981, %v1053
      %v1067 = vadd.f32 %v982, %v1057
      %v1068 = vadd.f32 %v983, %v1059
      %1069 = vrot.lane.b32.xlu0 %v542, 127
      %v1070 = vpop.permute.xlu0 %1069
      %1071 = vrot.lane.b32.xlu0 %v544, 127
      %v1072 = vpop.permute.xlu0 %1071
      %1073 = vrot.lane.b32.xlu0 %v546, 127
      %v1074 = vpop.permute.xlu0 %1073
      %1075 = vrot.lane.b32.xlu0 %v543, 127
      %v1076 = vpop.permute.xlu0 %1075
      %1077 = vrot.lane.b32.xlu0 %v545, 127
      %v1078 = vpop.permute.xlu0 %1077
      %1079 = vrot.lane.b32.xlu0 %v547, 127
      %v1080 = vpop.permute.xlu0 %1079
      %v1081 = vsel %vm294, %v1070, %v1076
      %v1082 = vsel %vm294, %v1072, %v1078
      %v1083 = vsel %vm294, %v1074, %v1080
      %v1084 = vsel %vm294, %v1076, %v1070
      %v1085 = vsel %vm294, %v1078, %v1072
      %v1086 = vsel %vm294, %v1080, %v1074
      %v1087 = vmul.f32 %v1081, %v303
      %v1088 = vmul.f32 %v1084, %v307
      %v1089 = vmul.f32 %v1082, %v303
      %v1090 = vmul.f32 %v1085, %v307
      %v1091 = vmul.f32 %v1083, %v303
      %v1092 = vmul.f32 %v1086, %v307
      %s1093 = scalar_lea.vmem %s3, 60
      %v1094 = vld [vmem:[%s1093] sm:$0xf]
      %v1095 = vld [vmem:[%s1093 + $0x4] sm:$0xf]
      %v1096 = vld [vmem:[%s1093 + $0x8] sm:$0xf]
      %v1097 = vpack.c.bf16 %v1089, %v1087
      %v1098 = vpack.c.bf16 %v1090, %v1088
      %v1099 = vpack.c.bf16 %v1091, %v1091
      %v1100 = vpack.c.bf16 %v1092, %v1092
      %v1104 = vunpack.c.l.b16 %v1094
      %v1105 = vunpack.c.l.b16 %v1095
      %v1106 = vunpack.c.l.b16 %v1096
      %v1107 = vpack.c.b16 %v1105, %v1104
      %v1108 = vpack.c.b16 %v1106, %v1106
      %v1110 = vsel %vm587, %v1107, 0
      %v1113 = vsel %vm587, %v1108, 0
      %v1116 = vsel %vm436, %v1099, 0
      %v1119 = vsel %vm436, %v1100, 0
      %1121 = vmatprep.subr.bf16.mxu0 %v1098
      %1122 = vmatpush1.bf16.msra.mxu0 %v1097
      %1123 = vmatprep.subr.bf16.mxu0 %v1119
      %1124 = vmatpush1.bf16.msra.mxu0 %v1116
      %1125 = vmatprep.subr.bf16.mxu0 0
      %1126 = vmatpush1.bf16.msra.mxu0 0
      %1127 = vmatprep.subr.bf16.mxu0 0
      %1128 = vmatpush1.bf16.msra.mxu0 0
      %1129 = vmatprep.subr.bf16.mxu0 0
      %1130 = vmatpush1.bf16.msra.mxu0 0
      %1131 = vmatprep.subr.bf16.mxu0 0
      %1132 = vmatpush1.bf16.msra.mxu0 0
      %1133 = vmatprep.subr.bf16.mxu0 0
      %1134 = vmatpush1.bf16.msra.mxu0 0
      %1135 = vmatprep.subr.bf16.mxu0 0
      %1136 = vmatpush1.bf16.msra.mxu0 0
      %1137 = vmatprep.subr.bf16.mxu0 0
      %1138 = vmatpush1.bf16.msra.mxu0 0
      %1139 = vmatprep.subr.bf16.mxu0 0
      %1140 = vmatpush1.bf16.msra.mxu0 0
      %1141 = vmatprep.subr.bf16.mxu0 0
      %1142 = vmatpush1.bf16.msra.mxu0 0
      %1143 = vmatprep.subr.bf16.mxu0 0
      %1144 = vmatpush1.bf16.msra.mxu0 0
      %1145 = vmatprep.subr.bf16.mxu0 0
      %1146 = vmatpush1.bf16.msra.mxu0 0
      %1147 = vmatprep.subr.bf16.mxu0 0
      %1148 = vmatpush1.bf16.msra.mxu0 0
      %1149 = vmatprep.subr.bf16.mxu0 0
      %1150 = vmatpush1.bf16.msra.mxu0 0
      %1151 = vmatprep.subr.bf16.mxu0 0
      %1152 = vmatpush1.bf16.msra.mxu0 0
      %1153 = vmatprep.mubr.bf16.mxu0 0
      %1154 = vmatmul.mubr.bf16.gmra.mrb[0].mxu0 %v1110
      %v1155 = vpop.f32.mrb[0].mxu0
      %v1156 = vadd.f32 0.0, %v1155
      %v1157 = vpop.f32.mrb[0].mxu0
      %v1158 = vadd.f32 0.0, %v1157
      %v1159 = vpop.f32.mrb[0].mxu0
      %v1160 = vadd.f32 0.0, %v1159
      %v1161 = vpop.f32.mrb[0].mxu0
      %v1162 = vadd.f32 0.0, %v1161
      %1163 = vmatprep.mubr.bf16.mxu0 0
      %1164 = vmatmul.mubr.bf16.gmra.mrb[0].mxu0 %v1113
      %v1165 = vpop.f32.mrb[0].mxu0
      %v1166 = vadd.f32 0.0, %v1165
      %v1167 = vpop.f32.mrb[0].mxu0
      %v1168 = vadd.f32 0.0, %v1167
      %v1169 = vpop.f32.mrb[0].mxu0
      %v1170 = vpop.f32.mrb[0].mxu0
      %1171 = vdwg.mxu0
      %v1172 = vadd.f32 %v1063, %v1156
      %v1173 = vadd.f32 %v1064, %v1158
      %v1174 = vadd.f32 %v1065, %v1160
      %v1175 = vadd.f32 %v1066, %v1162
      %v1176 = vadd.f32 %v1067, %v1166
      %v1177 = vadd.f32 %v1068, %v1168
      %1178 = vrot.lane.b32.xlu0 %v542, 113
      %v1179 = vpop.permute.xlu0 %1178
      %1180 = vrot.lane.b32.xlu0 %v544, 113
      %v1181 = vpop.permute.xlu0 %1180
      %1182 = vrot.lane.b32.xlu0 %v546, 113
      %v1183 = vpop.permute.xlu0 %1182
      %1184 = vrot.lane.b32.xlu0 %v543, 113
      %v1185 = vpop.permute.xlu0 %1184
      %1186 = vrot.lane.b32.xlu0 %v545, 113
      %v1187 = vpop.permute.xlu0 %1186
      %1188 = vrot.lane.b32.xlu0 %v547, 113
      %v1189 = vpop.permute.xlu0 %1188
      %v1190 = vsel %vm316, %v1179, %v1185
      %v1191 = vsel %vm316, %v1181, %v1187
      %v1192 = vsel %vm316, %v1183, %v1189
      %v1193 = vsel %vm316, %v1185, %v1179
      %v1194 = vsel %vm316, %v1187, %v1181
      %v1195 = vsel %vm316, %v1189, %v1183
      %v1196 = vmul.f32 %v1190, %v325
      %v1197 = vmul.f32 %v1193, %v329
      %v1198 = vmul.f32 %v1191, %v325
      %v1199 = vmul.f32 %v1194, %v329
      %v1200 = vmul.f32 %v1192, %v325
      %v1201 = vmul.f32 %v1195, %v329
      %s1202 = scalar_lea.vmem %s3, 72
      %v1203 = vld [vmem:[%s1202] sm:$0xf]
      %v1204 = vld [vmem:[%s1202 + $0x4] sm:$0xf]
      %v1205 = vld [vmem:[%s1202 + $0x8] sm:$0xf]
      %v1206 = vpack.c.bf16 %v1198, %v1196
      %v1207 = vpack.c.bf16 %v1199, %v1197
      %v1208 = vpack.c.bf16 %v1200, %v1200
      %v1209 = vpack.c.bf16 %v1201, %v1201
      %v1213 = vunpack.c.l.b16 %v1203
      %v1214 = vunpack.c.l.b16 %v1204
      %v1215 = vunpack.c.l.b16 %v1205
      %v1216 = vpack.c.b16 %v1214, %v1213
      %v1217 = vpack.c.b16 %v1215, %v1215
      %v1219 = vsel %vm587, %v1216, 0
      %v1222 = vsel %vm587, %v1217, 0
      %v1225 = vsel %vm436, %v1208, 0
      %v1228 = vsel %vm436, %v1209, 0
      %1230 = vmatprep.subr.bf16.mxu0 %v1207
      %1231 = vmatpush1.bf16.msra.mxu0 %v1206
      %1232 = vmatprep.subr.bf16.mxu0 %v1228
      %1233 = vmatpush1.bf16.msra.mxu0 %v1225
      %1234 = vmatprep.subr.bf16.mxu0 0
      %1235 = vmatpush1.bf16.msra.mxu0 0
      %1236 = vmatprep.subr.bf16.mxu0 0
      %1237 = vmatpush1.bf16.msra.mxu0 0
      %1238 = vmatprep.subr.bf16.mxu0 0
      %1239 = vmatpush1.bf16.msra.mxu0 0
      %1240 = vmatprep.subr.bf16.mxu0 0
      %1241 = vmatpush1.bf16.msra.mxu0 0
      %1242 = vmatprep.subr.bf16.mxu0 0
      %1243 = vmatpush1.bf16.msra.mxu0 0
      %1244 = vmatprep.subr.bf16.mxu0 0
      %1245 = vmatpush1.bf16.msra.mxu0 0
      %1246 = vmatprep.subr.bf16.mxu0 0
      %1247 = vmatpush1.bf16.msra.mxu0 0
      %1248 = vmatprep.subr.bf16.mxu0 0
      %1249 = vmatpush1.bf16.msra.mxu0 0
      %1250 = vmatprep.subr.bf16.mxu0 0
      %1251 = vmatpush1.bf16.msra.mxu0 0
      %1252 = vmatprep.subr.bf16.mxu0 0
      %1253 = vmatpush1.bf16.msra.mxu0 0
      %1254 = vmatprep.subr.bf16.mxu0 0
      %1255 = vmatpush1.bf16.msra.mxu0 0
      %1256 = vmatprep.subr.bf16.mxu0 0
      %1257 = vmatpush1.bf16.msra.mxu0 0
      %1258 = vmatprep.subr.bf16.mxu0 0
      %1259 = vmatpush1.bf16.msra.mxu0 0
      %1260 = vmatprep.subr.bf16.mxu0 0
      %1261 = vmatpush1.bf16.msra.mxu0 0
      %1262 = vmatprep.mubr.bf16.mxu0 0
      %1263 = vmatmul.mubr.bf16.gmra.mrb[0].mxu0 %v1219
      %v1264 = vpop.f32.mrb[0].mxu0
      %v1265 = vadd.f32 0.0, %v1264
      %v1266 = vpop.f32.mrb[0].mxu0
      %v1267 = vadd.f32 0.0, %v1266
      %v1268 = vpop.f32.mrb[0].mxu0
      %v1269 = vadd.f32 0.0, %v1268
      %v1270 = vpop.f32.mrb[0].mxu0
      %v1271 = vadd.f32 0.0, %v1270
      %1272 = vmatprep.mubr.bf16.mxu0 0
      %1273 = vmatmul.mubr.bf16.gmra.mrb[0].mxu0 %v1222
      %v1274 = vpop.f32.mrb[0].mxu0
      %v1275 = vadd.f32 0.0, %v1274
      %v1276 = vpop.f32.mrb[0].mxu0
      %v1277 = vadd.f32 0.0, %v1276
      %v1278 = vpop.f32.mrb[0].mxu0
      %v1279 = vpop.f32.mrb[0].mxu0
      %1280 = vdwg.mxu0
      %v1281 = vadd.f32 %v1172, %v1265
      %v1282 = vadd.f32 %v1173, %v1267
      %v1283 = vadd.f32 %v1174, %v1269
      %v1284 = vadd.f32 %v1175, %v1271
      %v1285 = vadd.f32 %v1176, %v1275
      %v1286 = vadd.f32 %v1177, %v1277
      %1287 = vrot.lane.b32.xlu0 %v542, 112
      %v1288 = vpop.permute.xlu0 %1287
      %1289 = vrot.lane.b32.xlu0 %v544, 112
      %v1290 = vpop.permute.xlu0 %1289
      %1291 = vrot.lane.b32.xlu0 %v546, 112
      %v1292 = vpop.permute.xlu0 %1291
      %1293 = vrot.lane.b32.xlu0 %v543, 112
      %v1294 = vpop.permute.xlu0 %1293
      %1295 = vrot.lane.b32.xlu0 %v545, 112
      %v1296 = vpop.permute.xlu0 %1295
      %1297 = vrot.lane.b32.xlu0 %v547, 112
      %v1298 = vpop.permute.xlu0 %1297
      %v1299 = vsel %vm338, %v1288, %v1294
      %v1300 = vsel %vm338, %v1290, %v1296
      %v1301 = vsel %vm338, %v1292, %v1298
      %v1302 = vsel %vm338, %v1294, %v1288
      %v1303 = vsel %vm338, %v1296, %v1290
      %v1304 = vsel %vm338, %v1298, %v1292
      %v1305 = vmul.f32 %v1299, %v347
      %v1306 = vmul.f32 %v1302, %v351
      %v1307 = vmul.f32 %v1300, %v347
      %v1308 = vmul.f32 %v1303, %v351
      %v1309 = vmul.f32 %v1301, %v347
      %v1310 = vmul.f32 %v1304, %v351
      %s1311 = scalar_lea.vmem %s3, 84
      %v1312 = vld [vmem:[%s1311] sm:$0xf]
      %v1313 = vld [vmem:[%s1311 + $0x4] sm:$0xf]
      %v1314 = vld [vmem:[%s1311 + $0x8] sm:$0xf]
      %v1315 = vpack.c.bf16 %v1307, %v1305
      %v1316 = vpack.c.bf16 %v1308, %v1306
      %v1317 = vpack.c.bf16 %v1309, %v1309
      %v1318 = vpack.c.bf16 %v1310, %v1310
      %v1322 = vunpack.c.l.b16 %v1312
      %v1323 = vunpack.c.l.b16 %v1313
      %v1324 = vunpack.c.l.b16 %v1314
      %v1325 = vpack.c.b16 %v1323, %v1322
      %v1326 = vpack.c.b16 %v1324, %v1324
      %v1328 = vsel %vm587, %v1325, 0
      %v1331 = vsel %vm587, %v1326, 0
      %v1334 = vsel %vm436, %v1317, 0
      %v1337 = vsel %vm436, %v1318, 0
      %1339 = vmatprep.subr.bf16.mxu0 %v1316
      %1340 = vmatpush1.bf16.msra.mxu0 %v1315
      %1341 = vmatprep.subr.bf16.mxu0 %v1337
      %1342 = vmatpush1.bf16.msra.mxu0 %v1334
      %1343 = vmatprep.subr.bf16.mxu0 0
      %1344 = vmatpush1.bf16.msra.mxu0 0
      %1345 = vmatprep.subr.bf16.mxu0 0
      %1346 = vmatpush1.bf16.msra.mxu0 0
      %1347 = vmatprep.subr.bf16.mxu0 0
      %1348 = vmatpush1.bf16.msra.mxu0 0
      %1349 = vmatprep.subr.bf16.mxu0 0
      %1350 = vmatpush1.bf16.msra.mxu0 0
      %1351 = vmatprep.subr.bf16.mxu0 0
      %1352 = vmatpush1.bf16.msra.mxu0 0
      %1353 = vmatprep.subr.bf16.mxu0 0
      %1354 = vmatpush1.bf16.msra.mxu0 0
      %1355 = vmatprep.subr.bf16.mxu0 0
      %1356 = vmatpush1.bf16.msra.mxu0 0
      %1357 = vmatprep.subr.bf16.mxu0 0
      %1358 = vmatpush1.bf16.msra.mxu0 0
      %1359 = vmatprep.subr.bf16.mxu0 0
      %1360 = vmatpush1.bf16.msra.mxu0 0
      %1361 = vmatprep.subr.bf16.mxu0 0
      %1362 = vmatpush1.bf16.msra.mxu0 0
      %1363 = vmatprep.subr.bf16.mxu0 0
      %1364 = vmatpush1.bf16.msra.mxu0 0
      %1365 = vmatprep.subr.bf16.mxu0 0
      %1366 = vmatpush1.bf16.msra.mxu0 0
      %1367 = vmatprep.subr.bf16.mxu0 0
      %1368 = vmatpush1.bf16.msra.mxu0 0
      %1369 = vmatprep.subr.bf16.mxu0 0
      %1370 = vmatpush1.bf16.msra.mxu0 0
      %1371 = vmatprep.mubr.bf16.mxu0 0
      %1372 = vmatmul.mubr.bf16.gmra.mrb[0].mxu0 %v1328
      %v1373 = vpop.f32.mrb[0].mxu0
      %v1374 = vadd.f32 0.0, %v1373
      %v1375 = vpop.f32.mrb[0].mxu0
      %v1376 = vadd.f32 0.0, %v1375
      %v1377 = vpop.f32.mrb[0].mxu0
      %v1378 = vadd.f32 0.0, %v1377
      %v1379 = vpop.f32.mrb[0].mxu0
      %v1380 = vadd.f32 0.0, %v1379
      %1381 = vmatprep.mubr.bf16.mxu0 0
      %1382 = vmatmul.mubr.bf16.gmra.mrb[0].mxu0 %v1331
      %v1383 = vpop.f32.mrb[0].mxu0
      %v1384 = vadd.f32 0.0, %v1383
      %v1385 = vpop.f32.mrb[0].mxu0
      %v1386 = vadd.f32 0.0, %v1385
      %v1387 = vpop.f32.mrb[0].mxu0
      %v1388 = vpop.f32.mrb[0].mxu0
      %1389 = vdwg.mxu0
      %v1390 = vadd.f32 %v1281, %v1374
      %v1391 = vadd.f32 %v1282, %v1376
      %v1392 = vadd.f32 %v1283, %v1378
      %v1393 = vadd.f32 %v1284, %v1380
      %v1394 = vadd.f32 %v1285, %v1384
      %v1395 = vadd.f32 %v1286, %v1386
      %1396 = vrot.lane.b32.xlu0 %v542, 111
      %v1397 = vpop.permute.xlu0 %1396
      %1398 = vrot.lane.b32.xlu0 %v544, 111
      %v1399 = vpop.permute.xlu0 %1398
      %1400 = vrot.lane.b32.xlu0 %v546, 111
      %v1401 = vpop.permute.xlu0 %1400
      %1402 = vrot.lane.b32.xlu0 %v543, 111
      %v1403 = vpop.permute.xlu0 %1402
      %1404 = vrot.lane.b32.xlu0 %v545, 111
      %v1405 = vpop.permute.xlu0 %1404
      %1406 = vrot.lane.b32.xlu0 %v547, 111
      %v1407 = vpop.permute.xlu0 %1406
      %v1408 = vsel %vm360, %v1397, %v1403
      %v1409 = vsel %vm360, %v1399, %v1405
      %v1410 = vsel %vm360, %v1401, %v1407
      %v1411 = vsel %vm360, %v1403, %v1397
      %v1412 = vsel %vm360, %v1405, %v1399
      %v1413 = vsel %vm360, %v1407, %v1401
      %v1414 = vmul.f32 %v1408, %v369
      %v1415 = vmul.f32 %v1411, %v373
      %v1416 = vmul.f32 %v1409, %v369
      %v1417 = vmul.f32 %v1412, %v373
      %v1418 = vmul.f32 %v1410, %v369
      %v1419 = vmul.f32 %v1413, %v373
      %s1420 = scalar_lea.vmem %s3, 96
      %v1421 = vld [vmem:[%s1420] sm:$0xf]
      %v1422 = vld [vmem:[%s1420 + $0x4] sm:$0xf]
      %v1423 = vld [vmem:[%s1420 + $0x8] sm:$0xf]
      %v1424 = vpack.c.bf16 %v1416, %v1414
      %v1425 = vpack.c.bf16 %v1417, %v1415
      %v1426 = vpack.c.bf16 %v1418, %v1418
      %v1427 = vpack.c.bf16 %v1419, %v1419
      %v1431 = vunpack.c.l.b16 %v1421
      %v1432 = vunpack.c.l.b16 %v1422
      %v1433 = vunpack.c.l.b16 %v1423
      %v1434 = vpack.c.b16 %v1432, %v1431
      %v1435 = vpack.c.b16 %v1433, %v1433
      %v1437 = vsel %vm587, %v1434, 0
      %v1440 = vsel %vm587, %v1435, 0
      %v1443 = vsel %vm436, %v1426, 0
      %v1446 = vsel %vm436, %v1427, 0
      %1448 = vmatprep.subr.bf16.mxu0 %v1425
      %1449 = vmatpush1.bf16.msra.mxu0 %v1424
      %1450 = vmatprep.subr.bf16.mxu0 %v1446
      %1451 = vmatpush1.bf16.msra.mxu0 %v1443
      %1452 = vmatprep.subr.bf16.mxu0 0
      %1453 = vmatpush1.bf16.msra.mxu0 0
      %1454 = vmatprep.subr.bf16.mxu0 0
      %1455 = vmatpush1.bf16.msra.mxu0 0
      %1456 = vmatprep.subr.bf16.mxu0 0
      %1457 = vmatpush1.bf16.msra.mxu0 0
      %1458 = vmatprep.subr.bf16.mxu0 0
      %1459 = vmatpush1.bf16.msra.mxu0 0
      %1460 = vmatprep.subr.bf16.mxu0 0
      %1461 = vmatpush1.bf16.msra.mxu0 0
      %1462 = vmatprep.subr.bf16.mxu0 0
      %1463 = vmatpush1.bf16.msra.mxu0 0
      %1464 = vmatprep.subr.bf16.mxu0 0
      %1465 = vmatpush1.bf16.msra.mxu0 0
      %1466 = vmatprep.subr.bf16.mxu0 0
      %1467 = vmatpush1.bf16.msra.mxu0 0
      %1468 = vmatprep.subr.bf16.mxu0 0
      %1469 = vmatpush1.bf16.msra.mxu0 0
      %1470 = vmatprep.subr.bf16.mxu0 0
      %1471 = vmatpush1.bf16.msra.mxu0 0
      %1472 = vmatprep.subr.bf16.mxu0 0
      %1473 = vmatpush1.bf16.msra.mxu0 0
      %1474 = vmatprep.subr.bf16.mxu0 0
      %1475 = vmatpush1.bf16.msra.mxu0 0
      %1476 = vmatprep.subr.bf16.mxu0 0
      %1477 = vmatpush1.bf16.msra.mxu0 0
      %1478 = vmatprep.subr.bf16.mxu0 0
      %1479 = vmatpush1.bf16.msra.mxu0 0
      %1480 = vmatprep.mubr.bf16.mxu0 0
      %1481 = vmatmul.mubr.bf16.gmra.mrb[0].mxu0 %v1437
      %v1482 = vpop.f32.mrb[0].mxu0
      %v1483 = vadd.f32 0.0, %v1482
      %v1484 = vpop.f32.mrb[0].mxu0
      %v1485 = vadd.f32 0.0, %v1484
      %v1486 = vpop.f32.mrb[0].mxu0
      %v1487 = vadd.f32 0.0, %v1486
      %v1488 = vpop.f32.mrb[0].mxu0
      %v1489 = vadd.f32 0.0, %v1488
      %1490 = vmatprep.mubr.bf16.mxu0 0
      %1491 = vmatmul.mubr.bf16.gmra.mrb[0].mxu0 %v1440
      %v1492 = vpop.f32.mrb[0].mxu0
      %v1493 = vadd.f32 0.0, %v1492
      %v1494 = vpop.f32.mrb[0].mxu0
      %v1495 = vadd.f32 0.0, %v1494
      %v1496 = vpop.f32.mrb[0].mxu0
      %v1497 = vpop.f32.mrb[0].mxu0
      %1498 = vdwg.mxu0
      %v1499 = vadd.f32 %v1390, %v1483
      %v1500 = vadd.f32 %v1391, %v1485
      %v1501 = vadd.f32 %v1392, %v1487
      %v1502 = vadd.f32 %v1393, %v1489
      %v1503 = vadd.f32 %v1394, %v1493
      %v1504 = vadd.f32 %v1395, %v1495
      %v1505 = vmul.f32 %v1499, 0.2
      %v1506 = vmul.f32 %v1500, 0.2
      %v1507 = vmul.f32 %v1501, 0.2
      %v1508 = vmul.f32 %v1502, 0.2
      %v1509 = vmul.f32 %v1503, 0.2
      %v1510 = vmul.f32 %v1504, 0.2
      %v1511 = vmax.f32 %v1499, %v1505
      %v1512 = vmax.f32 %v1500, %v1506
      %v1513 = vmax.f32 %v1501, %v1507
      %v1514 = vmax.f32 %v1502, %v1508
      %v1515 = vmax.f32 %v1503, %v1509
      %v1516 = vmax.f32 %v1504, %v1510
      %v1517 = vadd.f32 %v1511, %v530
      %v1518 = vadd.f32 %v1512, %v531
      %v1519 = vadd.f32 %v1513, %v532
      %v1520 = vadd.f32 %v1514, %v533
      %v1521 = vadd.f32 %v1515, %v534
      %v1522 = vadd.f32 %v1516, %v535
      %1523 = vst [vmem:[%s197] sm:$0xff] %v1517
      %1524 = vst [vmem:[%s197 + $0x8] sm:$0xff] %v1518
      %1525 = vst [vmem:[%s197 + $0x10] sm:$0xff] %v1519
      %1526 = vst [vmem:[%s197 + $0x18] sm:$0xff] %v1520
      %1527 = vst [vmem:[%s197 + $0x20] sm:$0xff] %v1521
      %1528 = vst [vmem:[%s197 + $0x28] sm:$0xff] %v1522
      %p1529 = scmp.lt.s32.totalorder %s15, 1
      %s1530 = scalar_select %p1529, %s15, 1
      %s1531 = smul.addr %s1530, 6
      %s1532 = smul.addr %s1531, 8
      %s1533 = scalar_lea.vmem %s4, %s1532
      // Predicated region
      $region37: #{network_forward.1} parent=35 // pred_check
        %p1534 = pneg %p122
      $region38: #{network_forward.1} parent=35 // pred_check_branch
        %1536 = sbr.rel (%p1534) target = $region40
      $region39: #{network_forward.1} parent=35 // pred_region
        _
      $region40: #{network_forward.1} parent=35 // pred_fallthru
        _
    $region36: #{network_forward.1} parent=5 // pred_fallthru
      _
    %p1537 = scmp.le.s32.totalorder 2, %s10
    // Predicated region
    $region41: #{network_forward.1} parent=5 // pred_check
      %p1538 = pneg %p1537
    $region42: #{network_forward.1} parent=5 // pred_check_branch
      %1540 = sbr.rel (%p1538) target = $region44
    $region43: #{network_forward.1} parent=5 // pred_region
      %s1541 = ssub.s32 %s10, 2
      // Predicated region
      $region45: #{network_forward.1} parent=43 // pred_check
        %p1542 = pneg %p128
      $region46: #{network_forward.1} parent=43 // pred_check_branch
        %1544 = sbr.rel (%p1542) target = $region48
      $region47: #{network_forward.1} parent=43 // pred_region
        %p1545 = scmp.lt.s32.totalorder %s16, 1
        %s1546 = scalar_select %p1545, %s16, 1
        %s1547 = smul.addr %s1546, 6
        %s1548 = smul.addr %s1547, 8
        %s1549 = scalar_lea.vmem %s4, %s1548
      $region48: #{network_forward.1} parent=43 // pred_fallthru
        _
    $region44: #{network_forward.1} parent=5 // pred_fallthru
      _
  $region6: #{network_forward.1} parent=0 // loop_footer
    %s14 = sadd.s32 1, %s10
  $region7: #{network_forward.1} parent=0 // loop_footer_branch
    %9 = sbr.rel target = $region3
  $region8: #{network_forward.1} parent=0 // loop_exit
    _

</llo_original>
